<compile_context>
chip_gen: v7x
topology: tpu7x:2x2x1
jax: 0.10.0
libtpu: 0.0.40
codegen_flags: <defaults>
</compile_context>

<pallas_src>
import functools
import math

import jax
import jax.numpy as jnp
from jax.experimental import pallas as pl
from jax.experimental.pallas import tpu as pltpu


# ---------------------------------------------------------------- parameter init
def _xavier_uniform(key, shape, gain):
    # mirrors torch.nn.init.xavier_uniform_ fan computation for >2-D tensors
    receptive = 1
    for s in shape[2:]:
        receptive *= s
    fan_in = shape[1] * receptive
    fan_out = shape[0] * receptive
    a = gain * math.sqrt(6.0 / (fan_in + fan_out))
    return jax.random.uniform(key, shape, jnp.float32, minval=-a, maxval=a)


# ---------------------------------------------------------------- graph glue (plain JAX)
def add_inverse_and_self(triples, num_nodes, num_rels):
    inv = jnp.stack([triples[:, 2], triples[:, 1] + num_rels, triples[:, 0]], axis=1)
    ids = jnp.arange(num_nodes, dtype=triples.dtype)
    self_loops = jnp.stack([ids, jnp.full_like(ids, 2 * num_rels), ids], axis=1)
    return jnp.concatenate([triples, inv, self_loops], axis=0)


def build_adj_horizontal(triples_plus, num_nodes, num_relations, general_edge_count):
    # stack_matrices(vertical_stacking=False): rows = subject, cols = rel*N + object
    s, r, o = triples_plus[:, 0], triples_plus[:, 1], triples_plus[:, 2]
    rows = s
    cols = r * num_nodes + o
    n_edges_total = triples_plus.shape[0]
    vals = jnp.ones((n_edges_total,), jnp.float32)
    # sum_sparse(..., row_normalisation=False): per-edge column sums
    colsum = jnp.zeros((num_relations * num_nodes,), jnp.float32).at[cols].add(vals)
    sums = colsum[cols]
    # swap sums of original <-> inverse edges (as in the reference forward)
    n = general_edge_count
    i = num_nodes
    sums = jnp.concatenate([sums[n:2 * n], sums[:n], sums[-i:]], axis=0)
    vals = vals / sums
    adj = jnp.zeros((num_nodes, num_relations * num_nodes), jnp.float32)
    return adj.at[rows, cols].add(vals)


def build_adj_vertical(triples_plus, num_nodes, num_relations):
    # stack_matrices(vertical_stacking=True): rows = rel*N + subject, cols = object
    s, r, o = triples_plus[:, 0], triples_plus[:, 1], triples_plus[:, 2]
    rows = r * num_nodes + s
    cols = o
    n_edges_total = triples_plus.shape[0]
    vals = jnp.ones((n_edges_total,), jnp.float32)
    rowsum = jnp.zeros((num_relations * num_nodes,), jnp.float32).at[rows].add(vals)
    sums = rowsum[rows]
    vals = vals / sums
    adj = jnp.zeros((num_relations * num_nodes, num_nodes), jnp.float32)
    return adj.at[rows, cols].add(vals)


# ---------------------------------------------------------------- fused Pallas kernel
def fused_rgcn_kernel(adj_h_ref, adj_v_ref, w1_ref, b1_ref, w2_ref, b2_ref,
                      out_ref, slab_ref, *, num_relations, nhid):
    """Fused 2-layer RGCN forward.

    adj_h_ref : (N, R*N)        horizontally stacked, column-normalised
    adj_v_ref : (R, N, N)       vertically stacked, row-normalised
    w1_ref    : (R*N, nhid)     layer-1 weights, flattened (featureless layer)
    b1_ref    : (1, nhid)
    w2_ref    : (pad(R*nhid), nclass)  layer-2 weights, flattened + zero-padded
    b2_ref    : (1, nclass)
    out_ref   : (N, nclass)
    slab_ref  : (N, pad(R*nhid)) VMEM scratch holding all AF_r side by side
    """
    # ----- layer 1: x = relu(adj_h @ W1_flat + b1) ; single K = R*N matmul -----
    x = jnp.dot(adj_h_ref[...], w1_ref[...], preferred_element_type=jnp.float32)
    x = jnp.maximum(x + b1_ref[...], 0.0)                      # (N, nhid) f32

    # ----- layer 2: AF slab + single flattened contraction -----
    # Zero the slab so the lane padding (R*nhid -> multiple of 128) contributes 0.
    slab_ref[...] = jnp.zeros_like(slab_ref)
    for r in range(num_relations):                             # static unroll, R = 7
        # (N, N) @ (N, nhid): K = N keeps the MXU fed (no K=16 tails).
        slab_ref[:, r * nhid:(r + 1) * nhid] = jnp.dot(
            adj_v_ref[r], x, preferred_element_type=jnp.float32)

    # One (N, pad(R*nhid)) @ (pad(R*nhid), nclass) matmul, bias fused.
    out_ref[...] = (jnp.dot(slab_ref[...], w2_ref[...],
                            preferred_element_type=jnp.float32)
                    + b2_ref[...])


def node_classifier_forward(adj_h, adj_v3, w1_flat, b1, w2_flat_pad, b2,
                            num_nodes, nhid, nclass, num_relations, slab_width):
    kernel = functools.partial(fused_rgcn_kernel,
                               num_relations=num_relations, nhid=nhid)
    vmem = pl.BlockSpec(memory_space=pltpu.MemorySpace.VMEM)
    return pl.pallas_call(
        kernel,
        out_shape=jax.ShapeDtypeStruct((num_nodes, nclass), jnp.float32),
        in_specs=[vmem, vmem, vmem, vmem, vmem, vmem],
        out_specs=vmem,
        scratch_shapes=[pltpu.VMEM((num_nodes, slab_width), jnp.float32)],
    )(adj_h, adj_v3, w1_flat, b1, w2_flat_pad, b2)


# ---------------------------------------------------------------- main
if __name__ == "__main__":
    nnodes = 128       # num_nodes (also in_dim of layer 1: featureless, nfeat=None)
    nrel = 3
    nhid = 16
    nclass = 8
    n_edges = 96
    R = 2 * nrel + 1   # relations + inverses + self-loop relation

    key = jax.random.PRNGKey(0)
    k_s, k_r, k_o, k_w1, k_w2 = jax.random.split(key, 5)
    subj = jax.random.randint(k_s, (n_edges,), 0, nnodes)
    rel = jax.random.randint(k_r, (n_edges,), 0, nrel)
    obj = jax.random.randint(k_o, (n_edges,), 0, nnodes)
    triples = jnp.stack([subj, rel, obj], axis=1).astype(jnp.int32)

    triples_plus = add_inverse_and_self(triples, nnodes, nrel)

    gain = math.sqrt(2.0)  # nn.init.calculate_gain('relu')
    w1 = _xavier_uniform(k_w1, (R, nnodes, nhid), gain)   # in_dim = num_nodes (featureless)
    b1 = jnp.zeros((1, nhid), jnp.float32)                # torch.nn.init.zeros_
    w2 = _xavier_uniform(k_w2, (R, nhid, nclass), gain)
    b2 = jnp.zeros((1, nclass), jnp.float32)

    # normalized stacked adjacency matrices (static graph glue, plain JAX)
    adj_h = build_adj_horizontal(triples_plus, nnodes, R, n_edges)   # (N, R*N)
    adj_v = build_adj_vertical(triples_plus, nnodes, R)              # (R*N, N)

    # ---- wrapper-side layout prep (free reshapes / zero-pad) ----
    w1_flat = w1.reshape(R * nnodes, nhid)                           # (896, 16)
    adj_v3 = adj_v.reshape(R, nnodes, nnodes)                        # (7, 128, 128)
    slab_width = ((R * nhid + 127) // 128) * 128                     # 112 -> 128
    w2_flat_pad = jnp.zeros((slab_width, nclass), jnp.float32)
    w2_flat_pad = w2_flat_pad.at[:R * nhid, :].set(w2.reshape(R * nhid, nclass))

    out = node_classifier_forward(adj_h, adj_v3, w1_flat, b1, w2_flat_pad, b2,
                                  nnodes, nhid, nclass, R, slab_width)
    out = jax.block_until_ready(out)

    # pure-JAX reference for correctness
    ref1 = jnp.maximum(adj_h @ w1.reshape(R * nnodes, nhid) + b1, 0.0)
    af = (adj_v @ ref1).reshape(R, nnodes, nhid)
    ref2 = jnp.einsum('rio,rni->no', w2, af) + b2

    assert out.shape == (nnodes, nclass)
    assert jnp.allclose(out, ref2, atol=1e-4, rtol=1e-4), float(jnp.max(jnp.abs(out - ref2)))
    print("KERNEL_OK")
</pallas_src>

<mosaic_0001>
module attributes {stable_mosaic.version = 11 : i64} {
  func.func @fused_rgcn_kernel(%arg0: memref<128x896xf32, #tpu.memory_space<vmem>>, %arg1: memref<7x128x128xf32, #tpu.memory_space<vmem>>, %arg2: memref<896x16xf32, #tpu.memory_space<vmem>>, %arg3: memref<1x16xf32, #tpu.memory_space<vmem>>, %arg4: memref<128x8xf32, #tpu.memory_space<vmem>>, %arg5: memref<1x8xf32, #tpu.memory_space<vmem>>, %arg6: memref<128x8xf32, #tpu.memory_space<vmem>>, %arg7: memref<128x128xf32, #tpu.memory_space<vmem>>) attributes {dimension_semantics = [], scalar_prefetch = 0 : i64, scratch_operands = 1 : i64, tpu.core_type = #tpu.core_type<tc>} {
    %c0 = arith.constant 0 : index
    %c0_0 = arith.constant 0 : index
    %0 = vector.load %arg0[%c0, %c0_0] : memref<128x896xf32, #tpu.memory_space<vmem>>, vector<128x896xf32>
    %c0_1 = arith.constant 0 : index
    %c0_2 = arith.constant 0 : index
    %1 = vector.load %arg2[%c0_1, %c0_2] : memref<896x16xf32, #tpu.memory_space<vmem>>, vector<896x16xf32>
    %cst = arith.constant dense<0.000000e+00> : vector<128x16xf32>
    %2 = tpu.matmul %0, %1, %cst {dimension_numbers = #tpu.dot_dimension_numbers<[1], [0], [0], [1], [0, 0, 1, 1], [], []>} : vector<128x896xf32>, vector<896x16xf32>, vector<128x16xf32> -> vector<128x16xf32>
    %c0_3 = arith.constant 0 : index
    %c0_4 = arith.constant 0 : index
    %3 = vector.load %arg3[%c0_3, %c0_4] : memref<1x16xf32, #tpu.memory_space<vmem>>, vector<1x16xf32>
    %4 = vector.broadcast %3 : vector<1x16xf32> to vector<128x16xf32>
    %5 = arith.addf %2, %4 : vector<128x16xf32>
    %cst_5 = arith.constant 0.000000e+00 : f32
    %6 = vector.broadcast %cst_5 : f32 to vector<128x16xf32>
    %7 = arith.maximumf %5, %6 : vector<128x16xf32>
    %cst_6 = arith.constant 0.000000e+00 : f32
    %8 = vector.broadcast %cst_6 : f32 to vector<128x128xf32>
    %c0_7 = arith.constant 0 : index
    %c0_8 = arith.constant 0 : index
    %9 = vector.load %arg7[%c0_7, %c0_8] : memref<128x128xf32, #tpu.memory_space<vmem>>, vector<128x128xf32>
    tpu.vector_store %arg7[%c0_7, %c0_8], %8 {strides = array<i32>} : memref<128x128xf32, #tpu.memory_space<vmem>>, vector<128x128xf32>,
    %c0_9 = arith.constant 0 : index
    %c0_10 = arith.constant 0 : index
    %c0_11 = arith.constant 0 : index
    %10 = vector.load %arg1[%c0_9, %c0_10, %c0_11] : memref<7x128x128xf32, #tpu.memory_space<vmem>>, vector<1x128x128xf32>
    %11 = vector.shape_cast %10 : vector<1x128x128xf32> to vector<128x128xf32>
    %cst_12 = arith.constant dense<0.000000e+00> : vector<128x16xf32>
    %12 = tpu.matmul %11, %7, %cst_12 {dimension_numbers = #tpu.dot_dimension_numbers<[1], [0], [0], [1], [0, 0, 1, 1], [], []>} : vector<128x128xf32>, vector<128x16xf32>, vector<128x16xf32> -> vector<128x16xf32>
    %c0_13 = arith.constant 0 : index
    %c0_14 = arith.constant 0 : index
    %13 = vector.load %arg7[%c0_13, %c0_14] : memref<128x128xf32, #tpu.memory_space<vmem>>, vector<128x16xf32>
    tpu.vector_store %arg7[%c0_13, %c0_14], %12 {strides = array<i32>} : memref<128x128xf32, #tpu.memory_space<vmem>>, vector<128x16xf32>,
    %c1 = arith.constant 1 : index
    %c0_15 = arith.constant 0 : index
    %c0_16 = arith.constant 0 : index
    %14 = vector.load %arg1[%c1, %c0_15, %c0_16] : memref<7x128x128xf32, #tpu.memory_space<vmem>>, vector<1x128x128xf32>
    %15 = vector.shape_cast %14 : vector<1x128x128xf32> to vector<128x128xf32>
    %cst_17 = arith.constant dense<0.000000e+00> : vector<128x16xf32>
    %16 = tpu.matmul %15, %7, %cst_17 {dimension_numbers = #tpu.dot_dimension_numbers<[1], [0], [0], [1], [0, 0, 1, 1], [], []>} : vector<128x128xf32>, vector<128x16xf32>, vector<128x16xf32> -> vector<128x16xf32>
    %c0_18 = arith.constant 0 : index
    %c16 = arith.constant 16 : index
    %17 = vector.load %arg7[%c0_18, %c16] : memref<128x128xf32, #tpu.memory_space<vmem>>, vector<128x16xf32>
    tpu.vector_store %arg7[%c0_18, %c16], %16 {strides = array<i32>} : memref<128x128xf32, #tpu.memory_space<vmem>>, vector<128x16xf32>,
    %c2 = arith.constant 2 : index
    %c0_19 = arith.constant 0 : index
    %c0_20 = arith.constant 0 : index
    %18 = vector.load %arg1[%c2, %c0_19, %c0_20] : memref<7x128x128xf32, #tpu.memory_space<vmem>>, vector<1x128x128xf32>
    %19 = vector.shape_cast %18 : vector<1x128x128xf32> to vector<128x128xf32>
    %cst_21 = arith.constant dense<0.000000e+00> : vector<128x16xf32>
    %20 = tpu.matmul %19, %7, %cst_21 {dimension_numbers = #tpu.dot_dimension_numbers<[1], [0], [0], [1], [0, 0, 1, 1], [], []>} : vector<128x128xf32>, vector<128x16xf32>, vector<128x16xf32> -> vector<128x16xf32>
    %c0_22 = arith.constant 0 : index
    %c32 = arith.constant 32 : index
    %21 = vector.load %arg7[%c0_22, %c32] : memref<128x128xf32, #tpu.memory_space<vmem>>, vector<128x16xf32>
    tpu.vector_store %arg7[%c0_22, %c32], %20 {strides = array<i32>} : memref<128x128xf32, #tpu.memory_space<vmem>>, vector<128x16xf32>,
    %c3 = arith.constant 3 : index
    %c0_23 = arith.constant 0 : index
    %c0_24 = arith.constant 0 : index
    %22 = vector.load %arg1[%c3, %c0_23, %c0_24] : memref<7x128x128xf32, #tpu.memory_space<vmem>>, vector<1x128x128xf32>
    %23 = vector.shape_cast %22 : vector<1x128x128xf32> to vector<128x128xf32>
    %cst_25 = arith.constant dense<0.000000e+00> : vector<128x16xf32>
    %24 = tpu.matmul %23, %7, %cst_25 {dimension_numbers = #tpu.dot_dimension_numbers<[1], [0], [0], [1], [0, 0, 1, 1], [], []>} : vector<128x128xf32>, vector<128x16xf32>, vector<128x16xf32> -> vector<128x16xf32>
    %c0_26 = arith.constant 0 : index
    %c48 = arith.constant 48 : index
    %25 = vector.load %arg7[%c0_26, %c48] : memref<128x128xf32, #tpu.memory_space<vmem>>, vector<128x16xf32>
    tpu.vector_store %arg7[%c0_26, %c48], %24 {strides = array<i32>} : memref<128x128xf32, #tpu.memory_space<vmem>>, vector<128x16xf32>,
    %c4 = arith.constant 4 : index
    %c0_27 = arith.constant 0 : index
    %c0_28 = arith.constant 0 : index
    %26 = vector.load %arg1[%c4, %c0_27, %c0_28] : memref<7x128x128xf32, #tpu.memory_space<vmem>>, vector<1x128x128xf32>
    %27 = vector.shape_cast %26 : vector<1x128x128xf32> to vector<128x128xf32>
    %cst_29 = arith.constant dense<0.000000e+00> : vector<128x16xf32>
    %28 = tpu.matmul %27, %7, %cst_29 {dimension_numbers = #tpu.dot_dimension_numbers<[1], [0], [0], [1], [0, 0, 1, 1], [], []>} : vector<128x128xf32>, vector<128x16xf32>, vector<128x16xf32> -> vector<128x16xf32>
    %c0_30 = arith.constant 0 : index
    %c64 = arith.constant 64 : index
    %29 = vector.load %arg7[%c0_30, %c64] : memref<128x128xf32, #tpu.memory_space<vmem>>, vector<128x16xf32>
    tpu.vector_store %arg7[%c0_30, %c64], %28 {strides = array<i32>} : memref<128x128xf32, #tpu.memory_space<vmem>>, vector<128x16xf32>,
    %c5 = arith.constant 5 : index
    %c0_31 = arith.constant 0 : index
    %c0_32 = arith.constant 0 : index
    %30 = vector.load %arg1[%c5, %c0_31, %c0_32] : memref<7x128x128xf32, #tpu.memory_space<vmem>>, vector<1x128x128xf32>
    %31 = vector.shape_cast %30 : vector<1x128x128xf32> to vector<128x128xf32>
    %cst_33 = arith.constant dense<0.000000e+00> : vector<128x16xf32>
    %32 = tpu.matmul %31, %7, %cst_33 {dimension_numbers = #tpu.dot_dimension_numbers<[1], [0], [0], [1], [0, 0, 1, 1], [], []>} : vector<128x128xf32>, vector<128x16xf32>, vector<128x16xf32> -> vector<128x16xf32>
    %c0_34 = arith.constant 0 : index
    %c80 = arith.constant 80 : index
    %33 = vector.load %arg7[%c0_34, %c80] : memref<128x128xf32, #tpu.memory_space<vmem>>, vector<128x16xf32>
    tpu.vector_store %arg7[%c0_34, %c80], %32 {strides = array<i32>} : memref<128x128xf32, #tpu.memory_space<vmem>>, vector<128x16xf32>,
    %c6 = arith.constant 6 : index
    %c0_35 = arith.constant 0 : index
    %c0_36 = arith.constant 0 : index
    %34 = vector.load %arg1[%c6, %c0_35, %c0_36] : memref<7x128x128xf32, #tpu.memory_space<vmem>>, vector<1x128x128xf32>
    %35 = vector.shape_cast %34 : vector<1x128x128xf32> to vector<128x128xf32>
    %cst_37 = arith.constant dense<0.000000e+00> : vector<128x16xf32>
    %36 = tpu.matmul %35, %7, %cst_37 {dimension_numbers = #tpu.dot_dimension_numbers<[1], [0], [0], [1], [0, 0, 1, 1], [], []>} : vector<128x128xf32>, vector<128x16xf32>, vector<128x16xf32> -> vector<128x16xf32>
    %c0_38 = arith.constant 0 : index
    %c96 = arith.constant 96 : index
    %37 = vector.load %arg7[%c0_38, %c96] : memref<128x128xf32, #tpu.memory_space<vmem>>, vector<128x16xf32>
    tpu.vector_store %arg7[%c0_38, %c96], %36 {strides = array<i32>} : memref<128x128xf32, #tpu.memory_space<vmem>>, vector<128x16xf32>,
    %c0_39 = arith.constant 0 : index
    %c0_40 = arith.constant 0 : index
    %38 = vector.load %arg7[%c0_39, %c0_40] : memref<128x128xf32, #tpu.memory_space<vmem>>, vector<128x128xf32>
    %c0_41 = arith.constant 0 : index
    %c0_42 = arith.constant 0 : index
    %39 = vector.load %arg4[%c0_41, %c0_42] : memref<128x8xf32, #tpu.memory_space<vmem>>, vector<128x8xf32>
    %cst_43 = arith.constant dense<0.000000e+00> : vector<128x8xf32>
    %40 = tpu.matmul %38, %39, %cst_43 {dimension_numbers = #tpu.dot_dimension_numbers<[1], [0], [0], [1], [0, 0, 1, 1], [], []>} : vector<128x128xf32>, vector<128x8xf32>, vector<128x8xf32> -> vector<128x8xf32>
    %c0_44 = arith.constant 0 : index
    %c0_45 = arith.constant 0 : index
    %41 = vector.load %arg5[%c0_44, %c0_45] : memref<1x8xf32, #tpu.memory_space<vmem>>, vector<1x8xf32>
    %42 = vector.broadcast %41 : vector<1x8xf32> to vector<128x8xf32>
    %43 = arith.addf %40, %42 : vector<128x8xf32>
    %c0_46 = arith.constant 0 : index
    %c0_47 = arith.constant 0 : index
    %44 = vector.load %arg6[%c0_46, %c0_47] : memref<128x8xf32, #tpu.memory_space<vmem>>, vector<128x8xf32>
    tpu.vector_store %arg6[%c0_46, %c0_47], %43 {strides = array<i32>} : memref<128x8xf32, #tpu.memory_space<vmem>>, vector<128x8xf32>,
    return
  }
}

</mosaic_0001>

<llo_original>
// kernel: tpu_custom_call.1
$region0: #{tpu_custom_call.1}
  #allocation0 [shape = 'u32[]', space=smem, size = 0x4, offset = 0x4, fixed_abs, tag = 'smem constant byte address 0x4 - core index']
  #allocation1 [shape = 'u32[144,128]{1,0:T(1,128)}', space=vmem, size = 0x12000, scoped, tag = 'internal scratch']
  #allocation2 [shape = 'f32[128,128]{1,0:T(8,128)}', space=vmem, size = 0x10000, scoped, tag = 'scratch operand']
  %s0 = inlined_call_operand.vmem [shape: f32[128,896], index: 0, kind: input, shape index: {}]
  %s1 = inlined_call_operand.hbm [shape: f32[7,128,128], index: 1, kind: input, shape index: {}]
  %s2 = inlined_call_operand.vmem [shape: f32[896,16], index: 2, kind: input, shape index: {}]
  %s3 = inlined_call_operand.vmem [shape: f32[1,16], index: 3, kind: input, shape index: {}]
  %s4 = inlined_call_operand.vmem [shape: f32[128,8], index: 4, kind: input, shape index: {}]
  %s5 = inlined_call_operand.vmem [shape: f32[1,8], index: 5, kind: input, shape index: {}]
  %s6 = inlined_call_operand.vmem [shape: f32[128,8], index: 6, kind: output, shape index: {}]
  %s7 = sld [smem:[#allocation0]]
  $region38: #{tpu_custom_call.1} parent=0
    _
  %s9 = ssub.s32 1, %s7
  %s10 = scalar_select 0, %s9, %s7
  $region1: #{tpu_custom_call.1} parent=0
    #allocation3 [shape = 'u8[458752]{0}', space=vmem, size = 0x70000, scoped, tag = 'input window, operand 1, single buffered']
    #allocation4 [shape = 's32[1]{0}', space=sflag, size = 0x4, scoped, tag = 'scoped memory for tpu_custom_call.1']
    %11 = vsyncpa [#allocation4], 0
    // Predicated region
    $region2: #{tpu_custom_call.1} parent=1 // pred_check
      _
    $region3: #{tpu_custom_call.1} parent=1 // pred_check_branch
      %13 = sbr.rel (0) target = $region5
    $region4: #{tpu_custom_call.1} parent=1 // pred_region
      _
    $region5: #{tpu_custom_call.1} parent=1 // pred_fallthru
      _
    // Predicated region
    $region6: #{tpu_custom_call.1} parent=1 // pred_check
      _
    $region7: #{tpu_custom_call.1} parent=1 // pred_check_branch
      %15 = sbr.rel (0) target = $region9
    $region8: #{tpu_custom_call.1} parent=1 // pred_region
      %s17 = ssub.s32 14336, 14336
      %18 = vsyncadd [#allocation4], %s17
      %s19 = sshll.u32 [#allocation3], 4
      %s20 = int_to_ptr.vmem [resolvable:$true] %s19
      %25 = dma.hbm_to_vmem [thread:$0]  %s1, 14336, %s20, [#allocation4], 128, 128, 8
    $region9: #{tpu_custom_call.1} parent=1 // pred_fallthru
      _
    // Predicated region
    $region10: #{tpu_custom_call.1} parent=1 // pred_check
      _
    $region11: #{tpu_custom_call.1} parent=1 // pred_check_branch
      %27 = sbr.rel (0) target = $region13
    $region12: #{tpu_custom_call.1} parent=1 // pred_region
      _
    $region13: #{tpu_custom_call.1} parent=1 // pred_fallthru
      _
    // Predicated region
    $region14: #{tpu_custom_call.1} parent=1 // pred_check
      _
    $region15: #{tpu_custom_call.1} parent=1 // pred_check_branch
      %29 = sbr.rel (0) target = $region17
    $region16: #{tpu_custom_call.1} parent=1 // pred_region
      _
    $region17: #{tpu_custom_call.1} parent=1 // pred_fallthru
      _
    // Predicated region
    $region18: #{tpu_custom_call.1} parent=1 // pred_check
      _
    $region19: #{tpu_custom_call.1} parent=1 // pred_check_branch
      %31 = sbr.rel (0) target = $region21
    $region20: #{tpu_custom_call.1} parent=1 // pred_region
      _
    $region21: #{tpu_custom_call.1} parent=1 // pred_fallthru
      _
    // Predicated region
    $region22: #{tpu_custom_call.1} parent=1 // pred_check
      _
    $region23: #{tpu_custom_call.1} parent=1 // pred_check_branch
      %33 = sbr.rel (0) target = $region25
    $region24: #{tpu_custom_call.1} parent=1 // pred_region
      _
    $region25: #{tpu_custom_call.1} parent=1 // pred_fallthru
      _
    // Predicated region
    $region26: #{tpu_custom_call.1} parent=1 // pred_check
      _
    $region27: #{tpu_custom_call.1} parent=1 // pred_check_branch
      %35 = sbr.rel (0) target = $region29
    $region28: #{tpu_custom_call.1} parent=1 // pred_region
      %36 = dma.done [#allocation4], 14336
    $region29: #{tpu_custom_call.1} parent=1 // pred_fallthru
      _
    %v37 = vld [vmem:[%s0] sm:$0xff]
    %v38 = vld [vmem:[%s0 + $0x8] sm:$0xff]
    %v39 = vld [vmem:[%s0 + $0x10] sm:$0xff]
    %v40 = vld [vmem:[%s0 + $0x18] sm:$0xff]
    %v41 = vld [vmem:[%s0 + $0x20] sm:$0xff]
    %v42 = vld [vmem:[%s0 + $0x28] sm:$0xff]
    %v43 = vld [vmem:[%s0 + $0x30] sm:$0xff]
    %v44 = vld [vmem:[%s0 + $0x38] sm:$0xff]
    %v45 = vld [vmem:[%s0 + $0x40] sm:$0xff]
    %v46 = vld [vmem:[%s0 + $0x48] sm:$0xff]
    %v47 = vld [vmem:[%s0 + $0x50] sm:$0xff]
    %v48 = vld [vmem:[%s0 + $0x58] sm:$0xff]
    %v49 = vld [vmem:[%s0 + $0x60] sm:$0xff]
    %v50 = vld [vmem:[%s0 + $0x68] sm:$0xff]
    %v51 = vld [vmem:[%s0 + $0x70] sm:$0xff]
    %v52 = vld [vmem:[%s0 + $0x78] sm:$0xff]
    %v53 = vld [vmem:[%s0 + $0x80] sm:$0xff]
    %v54 = vld [vmem:[%s0 + $0x88] sm:$0xff]
    %v55 = vld [vmem:[%s0 + $0x90] sm:$0xff]
    %v56 = vld [vmem:[%s0 + $0x98] sm:$0xff]
    %v57 = vld [vmem:[%s0 + $0xa0] sm:$0xff]
    %v58 = vld [vmem:[%s0 + $0xa8] sm:$0xff]
    %v59 = vld [vmem:[%s0 + $0xb0] sm:$0xff]
    %v60 = vld [vmem:[%s0 + $0xb8] sm:$0xff]
    %v61 = vld [vmem:[%s0 + $0xc0] sm:$0xff]
    %v62 = vld [vmem:[%s0 + $0xc8] sm:$0xff]
    %v63 = vld [vmem:[%s0 + $0xd0] sm:$0xff]
    %v64 = vld [vmem:[%s0 + $0xd8] sm:$0xff]
    %v65 = vld [vmem:[%s0 + $0xe0] sm:$0xff]
    %v66 = vld [vmem:[%s0 + $0xe8] sm:$0xff]
    %v67 = vld [vmem:[%s0 + $0xf0] sm:$0xff]
    %v68 = vld [vmem:[%s0 + $0xf8] sm:$0xff]
    %v69 = vld [vmem:[%s0 + $0x100] sm:$0xff]
    %v70 = vld [vmem:[%s0 + $0x108] sm:$0xff]
    %v71 = vld [vmem:[%s0 + $0x110] sm:$0xff]
    %v72 = vld [vmem:[%s0 + $0x118] sm:$0xff]
    %v73 = vld [vmem:[%s0 + $0x120] sm:$0xff]
    %v74 = vld [vmem:[%s0 + $0x128] sm:$0xff]
    %v75 = vld [vmem:[%s0 + $0x130] sm:$0xff]
    %v76 = vld [vmem:[%s0 + $0x138] sm:$0xff]
    %v77 = vld [vmem:[%s0 + $0x140] sm:$0xff]
    %v78 = vld [vmem:[%s0 + $0x148] sm:$0xff]
    %v79 = vld [vmem:[%s0 + $0x150] sm:$0xff]
    %v80 = vld [vmem:[%s0 + $0x158] sm:$0xff]
    %v81 = vld [vmem:[%s0 + $0x160] sm:$0xff]
    %v82 = vld [vmem:[%s0 + $0x168] sm:$0xff]
    %v83 = vld [vmem:[%s0 + $0x170] sm:$0xff]
    %v84 = vld [vmem:[%s0 + $0x178] sm:$0xff]
    %v85 = vld [vmem:[%s0 + $0x180] sm:$0xff]
    %v86 = vld [vmem:[%s0 + $0x188] sm:$0xff]
    %v87 = vld [vmem:[%s0 + $0x190] sm:$0xff]
    %v88 = vld [vmem:[%s0 + $0x198] sm:$0xff]
    %v89 = vld [vmem:[%s0 + $0x1a0] sm:$0xff]
    %v90 = vld [vmem:[%s0 + $0x1a8] sm:$0xff]
    %v91 = vld [vmem:[%s0 + $0x1b0] sm:$0xff]
    %v92 = vld [vmem:[%s0 + $0x1b8] sm:$0xff]
    %v93 = vld [vmem:[%s0 + $0x1c0] sm:$0xff]
    %v94 = vld [vmem:[%s0 + $0x1c8] sm:$0xff]
    %v95 = vld [vmem:[%s0 + $0x1d0] sm:$0xff]
    %v96 = vld [vmem:[%s0 + $0x1d8] sm:$0xff]
    %v97 = vld [vmem:[%s0 + $0x1e0] sm:$0xff]
    %v98 = vld [vmem:[%s0 + $0x1e8] sm:$0xff]
    %v99 = vld [vmem:[%s0 + $0x1f0] sm:$0xff]
    %v100 = vld [vmem:[%s0 + $0x1f8] sm:$0xff]
    %v101 = vld [vmem:[%s0 + $0x200] sm:$0xff]
    %v102 = vld [vmem:[%s0 + $0x208] sm:$0xff]
    %v103 = vld [vmem:[%s0 + $0x210] sm:$0xff]
    %v104 = vld [vmem:[%s0 + $0x218] sm:$0xff]
    %v105 = vld [vmem:[%s0 + $0x220] sm:$0xff]
    %v106 = vld [vmem:[%s0 + $0x228] sm:$0xff]
    %v107 = vld [vmem:[%s0 + $0x230] sm:$0xff]
    %v108 = vld [vmem:[%s0 + $0x238] sm:$0xff]
    %v109 = vld [vmem:[%s0 + $0x240] sm:$0xff]
    %v110 = vld [vmem:[%s0 + $0x248] sm:$0xff]
    %v111 = vld [vmem:[%s0 + $0x250] sm:$0xff]
    %v112 = vld [vmem:[%s0 + $0x258] sm:$0xff]
    %v113 = vld [vmem:[%s0 + $0x260] sm:$0xff]
    %v114 = vld [vmem:[%s0 + $0x268] sm:$0xff]
    %v115 = vld [vmem:[%s0 + $0x270] sm:$0xff]
    %v116 = vld [vmem:[%s0 + $0x278] sm:$0xff]
    %v117 = vld [vmem:[%s0 + $0x280] sm:$0xff]
    %v118 = vld [vmem:[%s0 + $0x288] sm:$0xff]
    %v119 = vld [vmem:[%s0 + $0x290] sm:$0xff]
    %v120 = vld [vmem:[%s0 + $0x298] sm:$0xff]
    %v121 = vld [vmem:[%s0 + $0x2a0] sm:$0xff]
    %v122 = vld [vmem:[%s0 + $0x2a8] sm:$0xff]
    %v123 = vld [vmem:[%s0 + $0x2b0] sm:$0xff]
    %v124 = vld [vmem:[%s0 + $0x2b8] sm:$0xff]
    %v125 = vld [vmem:[%s0 + $0x2c0] sm:$0xff]
    %v126 = vld [vmem:[%s0 + $0x2c8] sm:$0xff]
    %v127 = vld [vmem:[%s0 + $0x2d0] sm:$0xff]
    %v128 = vld [vmem:[%s0 + $0x2d8] sm:$0xff]
    %v129 = vld [vmem:[%s0 + $0x2e0] sm:$0xff]
    %v130 = vld [vmem:[%s0 + $0x2e8] sm:$0xff]
    %v131 = vld [vmem:[%s0 + $0x2f0] sm:$0xff]
    %v132 = vld [vmem:[%s0 + $0x2f8] sm:$0xff]
    %v133 = vld [vmem:[%s0 + $0x300] sm:$0xff]
    %v134 = vld [vmem:[%s0 + $0x308] sm:$0xff]
    %v135 = vld [vmem:[%s0 + $0x310] sm:$0xff]
    %v136 = vld [vmem:[%s0 + $0x318] sm:$0xff]
    %v137 = vld [vmem:[%s0 + $0x320] sm:$0xff]
    %v138 = vld [vmem:[%s0 + $0x328] sm:$0xff]
    %v139 = vld [vmem:[%s0 + $0x330] sm:$0xff]
    %v140 = vld [vmem:[%s0 + $0x338] sm:$0xff]
    %v141 = vld [vmem:[%s0 + $0x340] sm:$0xff]
    %v142 = vld [vmem:[%s0 + $0x348] sm:$0xff]
    %v143 = vld [vmem:[%s0 + $0x350] sm:$0xff]
    %v144 = vld [vmem:[%s0 + $0x358] sm:$0xff]
    %v145 = vld [vmem:[%s0 + $0x360] sm:$0xff]
    %v146 = vld [vmem:[%s0 + $0x368] sm:$0xff]
    %v147 = vld [vmem:[%s0 + $0x370] sm:$0xff]
    %v148 = vld [vmem:[%s0 + $0x378] sm:$0xff]
    %v149 = vld [vmem:[%s2] sm:$0xff]
    %v150 = vld [vmem:[%s2 + $0x8] sm:$0xff]
    %v151 = vld [vmem:[%s2 + $0x10] sm:$0xff]
    %v152 = vld [vmem:[%s2 + $0x18] sm:$0xff]
    %v153 = vld [vmem:[%s2 + $0x20] sm:$0xff]
    %v154 = vld [vmem:[%s2 + $0x28] sm:$0xff]
    %v155 = vld [vmem:[%s2 + $0x30] sm:$0xff]
    %v156 = vld [vmem:[%s2 + $0x38] sm:$0xff]
    %v157 = vld [vmem:[%s2 + $0x40] sm:$0xff]
    %v158 = vld [vmem:[%s2 + $0x48] sm:$0xff]
    %v159 = vld [vmem:[%s2 + $0x50] sm:$0xff]
    %v160 = vld [vmem:[%s2 + $0x58] sm:$0xff]
    %v161 = vld [vmem:[%s2 + $0x60] sm:$0xff]
    %v162 = vld [vmem:[%s2 + $0x68] sm:$0xff]
    %v163 = vld [vmem:[%s2 + $0x70] sm:$0xff]
    %v164 = vld [vmem:[%s2 + $0x78] sm:$0xff]
    %v165 = vld [vmem:[%s2 + $0x80] sm:$0xff]
    %v166 = vld [vmem:[%s2 + $0x88] sm:$0xff]
    %v167 = vld [vmem:[%s2 + $0x90] sm:$0xff]
    %v168 = vld [vmem:[%s2 + $0x98] sm:$0xff]
    %v169 = vld [vmem:[%s2 + $0xa0] sm:$0xff]
    %v170 = vld [vmem:[%s2 + $0xa8] sm:$0xff]
    %v171 = vld [vmem:[%s2 + $0xb0] sm:$0xff]
    %v172 = vld [vmem:[%s2 + $0xb8] sm:$0xff]
    %v173 = vld [vmem:[%s2 + $0xc0] sm:$0xff]
    %v174 = vld [vmem:[%s2 + $0xc8] sm:$0xff]
    %v175 = vld [vmem:[%s2 + $0xd0] sm:$0xff]
    %v176 = vld [vmem:[%s2 + $0xd8] sm:$0xff]
    %v177 = vld [vmem:[%s2 + $0xe0] sm:$0xff]
    %v178 = vld [vmem:[%s2 + $0xe8] sm:$0xff]
    %v179 = vld [vmem:[%s2 + $0xf0] sm:$0xff]
    %v180 = vld [vmem:[%s2 + $0xf8] sm:$0xff]
    %v181 = vld [vmem:[%s2 + $0x100] sm:$0xff]
    %v182 = vld [vmem:[%s2 + $0x108] sm:$0xff]
    %v183 = vld [vmem:[%s2 + $0x110] sm:$0xff]
    %v184 = vld [vmem:[%s2 + $0x118] sm:$0xff]
    %v185 = vld [vmem:[%s2 + $0x120] sm:$0xff]
    %v186 = vld [vmem:[%s2 + $0x128] sm:$0xff]
    %v187 = vld [vmem:[%s2 + $0x130] sm:$0xff]
    %v188 = vld [vmem:[%s2 + $0x138] sm:$0xff]
    %v189 = vld [vmem:[%s2 + $0x140] sm:$0xff]
    %v190 = vld [vmem:[%s2 + $0x148] sm:$0xff]
    %v191 = vld [vmem:[%s2 + $0x150] sm:$0xff]
    %v192 = vld [vmem:[%s2 + $0x158] sm:$0xff]
    %v193 = vld [vmem:[%s2 + $0x160] sm:$0xff]
    %v194 = vld [vmem:[%s2 + $0x168] sm:$0xff]
    %v195 = vld [vmem:[%s2 + $0x170] sm:$0xff]
    %v196 = vld [vmem:[%s2 + $0x178] sm:$0xff]
    %v197 = vld [vmem:[%s2 + $0x180] sm:$0xff]
    %v198 = vld [vmem:[%s2 + $0x188] sm:$0xff]
    %v199 = vld [vmem:[%s2 + $0x190] sm:$0xff]
    %v200 = vld [vmem:[%s2 + $0x198] sm:$0xff]
    %v201 = vld [vmem:[%s2 + $0x1a0] sm:$0xff]
    %v202 = vld [vmem:[%s2 + $0x1a8] sm:$0xff]
    %v203 = vld [vmem:[%s2 + $0x1b0] sm:$0xff]
    %v204 = vld [vmem:[%s2 + $0x1b8] sm:$0xff]
    %v205 = vld [vmem:[%s2 + $0x1c0] sm:$0xff]
    %v206 = vld [vmem:[%s2 + $0x1c8] sm:$0xff]
    %v207 = vld [vmem:[%s2 + $0x1d0] sm:$0xff]
    %v208 = vld [vmem:[%s2 + $0x1d8] sm:$0xff]
    %v209 = vld [vmem:[%s2 + $0x1e0] sm:$0xff]
    %v210 = vld [vmem:[%s2 + $0x1e8] sm:$0xff]
    %v211 = vld [vmem:[%s2 + $0x1f0] sm:$0xff]
    %v212 = vld [vmem:[%s2 + $0x1f8] sm:$0xff]
    %v213 = vld [vmem:[%s2 + $0x200] sm:$0xff]
    %v214 = vld [vmem:[%s2 + $0x208] sm:$0xff]
    %v215 = vld [vmem:[%s2 + $0x210] sm:$0xff]
    %v216 = vld [vmem:[%s2 + $0x218] sm:$0xff]
    %v217 = vld [vmem:[%s2 + $0x220] sm:$0xff]
    %v218 = vld [vmem:[%s2 + $0x228] sm:$0xff]
    %v219 = vld [vmem:[%s2 + $0x230] sm:$0xff]
    %v220 = vld [vmem:[%s2 + $0x238] sm:$0xff]
    %v221 = vld [vmem:[%s2 + $0x240] sm:$0xff]
    %v222 = vld [vmem:[%s2 + $0x248] sm:$0xff]
    %v223 = vld [vmem:[%s2 + $0x250] sm:$0xff]
    %v224 = vld [vmem:[%s2 + $0x258] sm:$0xff]
    %v225 = vld [vmem:[%s2 + $0x260] sm:$0xff]
    %v226 = vld [vmem:[%s2 + $0x268] sm:$0xff]
    %v227 = vld [vmem:[%s2 + $0x270] sm:$0xff]
    %v228 = vld [vmem:[%s2 + $0x278] sm:$0xff]
    %v229 = vld [vmem:[%s2 + $0x280] sm:$0xff]
    %v230 = vld [vmem:[%s2 + $0x288] sm:$0xff]
    %v231 = vld [vmem:[%s2 + $0x290] sm:$0xff]
    %v232 = vld [vmem:[%s2 + $0x298] sm:$0xff]
    %v233 = vld [vmem:[%s2 + $0x2a0] sm:$0xff]
    %v234 = vld [vmem:[%s2 + $0x2a8] sm:$0xff]
    %v235 = vld [vmem:[%s2 + $0x2b0] sm:$0xff]
    %v236 = vld [vmem:[%s2 + $0x2b8] sm:$0xff]
    %v237 = vld [vmem:[%s2 + $0x2c0] sm:$0xff]
    %v238 = vld [vmem:[%s2 + $0x2c8] sm:$0xff]
    %v239 = vld [vmem:[%s2 + $0x2d0] sm:$0xff]
    %v240 = vld [vmem:[%s2 + $0x2d8] sm:$0xff]
    %v241 = vld [vmem:[%s2 + $0x2e0] sm:$0xff]
    %v242 = vld [vmem:[%s2 + $0x2e8] sm:$0xff]
    %v243 = vld [vmem:[%s2 + $0x2f0] sm:$0xff]
    %v244 = vld [vmem:[%s2 + $0x2f8] sm:$0xff]
    %v245 = vld [vmem:[%s2 + $0x300] sm:$0xff]
    %v246 = vld [vmem:[%s2 + $0x308] sm:$0xff]
    %v247 = vld [vmem:[%s2 + $0x310] sm:$0xff]
    %v248 = vld [vmem:[%s2 + $0x318] sm:$0xff]
    %v249 = vld [vmem:[%s2 + $0x320] sm:$0xff]
    %v250 = vld [vmem:[%s2 + $0x328] sm:$0xff]
    %v251 = vld [vmem:[%s2 + $0x330] sm:$0xff]
    %v252 = vld [vmem:[%s2 + $0x338] sm:$0xff]
    %v253 = vld [vmem:[%s2 + $0x340] sm:$0xff]
    %v254 = vld [vmem:[%s2 + $0x348] sm:$0xff]
    %v255 = vld [vmem:[%s2 + $0x350] sm:$0xff]
    %v256 = vld [vmem:[%s2 + $0x358] sm:$0xff]
    %v257 = vld [vmem:[%s2 + $0x360] sm:$0xff]
    %v258 = vld [vmem:[%s2 + $0x368] sm:$0xff]
    %v259 = vld [vmem:[%s2 + $0x370] sm:$0xff]
    %v260 = vld [vmem:[%s2 + $0x378] sm:$0xff]
    %v261 = vld [vmem:[%s3] sm:$0x1]
    %v263 = vlaneseq
    %v264 = vshrl.u32 %v263, 7
    %v265 = vsub.s32 0, %v264
    %v266 = vrot.slane %v261, %v265
    %268 = vmatprep.subr.mxu0 0.0
    %269 = vmatpush1.msra.mxu0 %v149
    %270 = vmatprep.subr.mxu0 0.0
    %271 = vmatpush1.msra.mxu0 %v150
    %272 = vmatprep.subr.mxu0 0.0
    %273 = vmatpush1.msra.mxu0 %v151
    %274 = vmatprep.subr.mxu0 0.0
    %275 = vmatpush1.msra.mxu0 %v152
    %276 = vmatprep.subr.mxu0 0.0
    %277 = vmatpush1.msra.mxu0 %v153
    %278 = vmatprep.subr.mxu0 0.0
    %279 = vmatpush1.msra.mxu0 %v154
    %280 = vmatprep.subr.mxu0 0.0
    %281 = vmatpush1.msra.mxu0 %v155
    %282 = vmatprep.subr.mxu0 0.0
    %283 = vmatpush1.msra.mxu0 %v156
    %284 = vmatprep.subr.mxu0 0.0
    %285 = vmatpush1.msra.mxu0 %v157
    %286 = vmatprep.subr.mxu0 0.0
    %287 = vmatpush1.msra.mxu0 %v158
    %288 = vmatprep.subr.mxu0 0.0
    %289 = vmatpush1.msra.mxu0 %v159
    %290 = vmatprep.subr.mxu0 0.0
    %291 = vmatpush1.msra.mxu0 %v160
    %292 = vmatprep.subr.mxu0 0.0
    %293 = vmatpush1.msra.mxu0 %v161
    %294 = vmatprep.subr.mxu0 0.0
    %295 = vmatpush1.msra.mxu0 %v162
    %296 = vmatprep.subr.mxu0 0.0
    %297 = vmatpush1.msra.mxu0 %v163
    %298 = vmatprep.subr.mxu0 0.0
    %299 = vmatpush1.msra.mxu0 %v164
    %300 = vmatprep.subr.mxu0 0.0
    %301 = vmatpush1.msra.mxu0 %v165
    %302 = vmatprep.subr.mxu0 0.0
    %303 = vmatpush1.msra.mxu0 %v166
    %304 = vmatprep.subr.mxu0 0.0
    %305 = vmatpush1.msra.mxu0 %v167
    %306 = vmatprep.subr.mxu0 0.0
    %307 = vmatpush1.msra.mxu0 %v168
    %308 = vmatprep.subr.mxu0 0.0
    %309 = vmatpush1.msra.mxu0 %v169
    %310 = vmatprep.subr.mxu0 0.0
    %311 = vmatpush1.msra.mxu0 %v170
    %312 = vmatprep.subr.mxu0 0.0
    %313 = vmatpush1.msra.mxu0 %v171
    %314 = vmatprep.subr.mxu0 0.0
    %315 = vmatpush1.msra.mxu0 %v172
    %316 = vmatprep.subr.mxu0 0.0
    %317 = vmatpush1.msra.mxu0 %v173
    %318 = vmatprep.subr.mxu0 0.0
    %319 = vmatpush1.msra.mxu0 %v174
    %320 = vmatprep.subr.mxu0 0.0
    %321 = vmatpush1.msra.mxu0 %v175
    %322 = vmatprep.subr.mxu0 0.0
    %323 = vmatpush1.msra.mxu0 %v176
    %324 = vmatprep.subr.mxu0 0.0
    %325 = vmatpush1.msra.mxu0 %v177
    %326 = vmatprep.subr.mxu0 0.0
    %327 = vmatpush1.msra.mxu0 %v178
    %328 = vmatprep.subr.mxu0 0.0
    %329 = vmatpush1.msra.mxu0 %v179
    %330 = vmatprep.subr.mxu0 0.0
    %331 = vmatpush1.msra.mxu0 %v180
    %332 = vmatprep.mubr.f32.mxu0 %v38
    %333 = vmatmul.mubr.f32.gmra.mrb[0].mxu0 %v37
    %v334 = vpop.f32.mrb[0].mxu0
    %v335 = vadd.f32 %v266, %v334
    %v336 = vpop.f32.mrb[0].mxu0
    %337 = vmatprep.mubr.f32.mxu0 %v45
    %338 = vmatmul.mubr.f32.gmra.mrb[0].mxu0 %v44
    %v339 = vpop.f32.mrb[0].mxu0
    %v340 = vadd.f32 %v266, %v339
    %v341 = vpop.f32.mrb[0].mxu0
    %342 = vmatprep.mubr.f32.mxu0 %v52
    %343 = vmatmul.mubr.f32.gmra.mrb[0].mxu0 %v51
    %v344 = vpop.f32.mrb[0].mxu0
    %v345 = vadd.f32 %v266, %v344
    %v346 = vpop.f32.mrb[0].mxu0
    %347 = vmatprep.mubr.f32.mxu0 %v59
    %348 = vmatmul.mubr.f32.gmra.mrb[0].mxu0 %v58
    %v349 = vpop.f32.mrb[0].mxu0
    %v350 = vadd.f32 %v266, %v349
    %v351 = vpop.f32.mrb[0].mxu0
    %352 = vmatprep.mubr.f32.mxu0 %v66
    %353 = vmatmul.mubr.f32.gmra.mrb[0].mxu0 %v65
    %v354 = vpop.f32.mrb[0].mxu0
    %v355 = vadd.f32 %v266, %v354
    %v356 = vpop.f32.mrb[0].mxu0
    %357 = vmatprep.mubr.f32.mxu0 %v73
    %358 = vmatmul.mubr.f32.gmra.mrb[0].mxu0 %v72
    %v359 = vpop.f32.mrb[0].mxu0
    %v360 = vadd.f32 %v266, %v359
    %v361 = vpop.f32.mrb[0].mxu0
    %362 = vmatprep.mubr.f32.mxu0 %v80
    %363 = vmatmul.mubr.f32.gmra.mrb[0].mxu0 %v79
    %v364 = vpop.f32.mrb[0].mxu0
    %v365 = vadd.f32 %v266, %v364
    %v366 = vpop.f32.mrb[0].mxu0
    %367 = vmatprep.mubr.f32.mxu0 %v87
    %368 = vmatmul.mubr.f32.gmra.mrb[0].mxu0 %v86
    %v369 = vpop.f32.mrb[0].mxu0
    %v370 = vadd.f32 %v266, %v369
    %v371 = vpop.f32.mrb[0].mxu0
    %372 = vmatprep.mubr.f32.mxu0 %v94
    %373 = vmatmul.mubr.f32.gmra.mrb[0].mxu0 %v93
    %v374 = vpop.f32.mrb[0].mxu0
    %v375 = vadd.f32 %v266, %v374
    %v376 = vpop.f32.mrb[0].mxu0
    %377 = vmatprep.mubr.f32.mxu0 %v101
    %378 = vmatmul.mubr.f32.gmra.mrb[0].mxu0 %v100
    %v379 = vpop.f32.mrb[0].mxu0
    %v380 = vadd.f32 %v266, %v379
    %v381 = vpop.f32.mrb[0].mxu0
    %382 = vmatprep.mubr.f32.mxu0 %v108
    %383 = vmatmul.mubr.f32.gmra.mrb[0].mxu0 %v107
    %v384 = vpop.f32.mrb[0].mxu0
    %v385 = vadd.f32 %v266, %v384
    %v386 = vpop.f32.mrb[0].mxu0
    %387 = vmatprep.mubr.f32.mxu0 %v115
    %388 = vmatmul.mubr.f32.gmra.mrb[0].mxu0 %v114
    %v389 = vpop.f32.mrb[0].mxu0
    %v390 = vadd.f32 %v266, %v389
    %v391 = vpop.f32.mrb[0].mxu0
    %392 = vmatprep.mubr.f32.mxu0 %v122
    %393 = vmatmul.mubr.f32.gmra.mrb[0].mxu0 %v121
    %v394 = vpop.f32.mrb[0].mxu0
    %v395 = vadd.f32 %v266, %v394
    %v396 = vpop.f32.mrb[0].mxu0
    %397 = vmatprep.mubr.f32.mxu0 %v129
    %398 = vmatmul.mubr.f32.gmra.mrb[0].mxu0 %v128
    %v399 = vpop.f32.mrb[0].mxu0
    %v400 = vadd.f32 %v266, %v399
    %v401 = vpop.f32.mrb[0].mxu0
    %402 = vmatprep.mubr.f32.mxu0 %v136
    %403 = vmatmul.mubr.f32.gmra.mrb[0].mxu0 %v135
    %v404 = vpop.f32.mrb[0].mxu0
    %v405 = vadd.f32 %v266, %v404
    %v406 = vpop.f32.mrb[0].mxu0
    %407 = vmatprep.mubr.f32.mxu0 %v143
    %408 = vmatmul.mubr.f32.gmra.mrb[0].mxu0 %v142
    %v409 = vpop.f32.mrb[0].mxu0
    %v410 = vadd.f32 %v266, %v409
    %v411 = vpop.f32.mrb[0].mxu0
    %412 = vdwg.mxu0
    %413 = vmatprep.subr.mxu0 0.0
    %414 = vmatpush1.msra.mxu0 %v181
    %415 = vmatprep.subr.mxu0 0.0
    %416 = vmatpush1.msra.mxu0 %v182
    %417 = vmatprep.subr.mxu0 0.0
    %418 = vmatpush1.msra.mxu0 %v183
    %419 = vmatprep.subr.mxu0 0.0
    %420 = vmatpush1.msra.mxu0 %v184
    %421 = vmatprep.subr.mxu0 0.0
    %422 = vmatpush1.msra.mxu0 %v185
    %423 = vmatprep.subr.mxu0 0.0
    %424 = vmatpush1.msra.mxu0 %v186
    %425 = vmatprep.subr.mxu0 0.0
    %426 = vmatpush1.msra.mxu0 %v187
    %427 = vmatprep.subr.mxu0 0.0
    %428 = vmatpush1.msra.mxu0 %v188
    %429 = vmatprep.subr.mxu0 0.0
    %430 = vmatpush1.msra.mxu0 %v189
    %431 = vmatprep.subr.mxu0 0.0
    %432 = vmatpush1.msra.mxu0 %v190
    %433 = vmatprep.subr.mxu0 0.0
    %434 = vmatpush1.msra.mxu0 %v191
    %435 = vmatprep.subr.mxu0 0.0
    %436 = vmatpush1.msra.mxu0 %v192
    %437 = vmatprep.subr.mxu0 0.0
    %438 = vmatpush1.msra.mxu0 %v193
    %439 = vmatprep.subr.mxu0 0.0
    %440 = vmatpush1.msra.mxu0 %v194
    %441 = vmatprep.subr.mxu0 0.0
    %442 = vmatpush1.msra.mxu0 %v195
    %443 = vmatprep.subr.mxu0 0.0
    %444 = vmatpush1.msra.mxu0 %v196
    %445 = vmatprep.subr.mxu0 0.0
    %446 = vmatpush1.msra.mxu0 %v197
    %447 = vmatprep.subr.mxu0 0.0
    %448 = vmatpush1.msra.mxu0 %v198
    %449 = vmatprep.subr.mxu0 0.0
    %450 = vmatpush1.msra.mxu0 %v199
    %451 = vmatprep.subr.mxu0 0.0
    %452 = vmatpush1.msra.mxu0 %v200
    %453 = vmatprep.subr.mxu0 0.0
    %454 = vmatpush1.msra.mxu0 %v201
    %455 = vmatprep.subr.mxu0 0.0
    %456 = vmatpush1.msra.mxu0 %v202
    %457 = vmatprep.subr.mxu0 0.0
    %458 = vmatpush1.msra.mxu0 %v203
    %459 = vmatprep.subr.mxu0 0.0
    %460 = vmatpush1.msra.mxu0 %v204
    %461 = vmatprep.subr.mxu0 0.0
    %462 = vmatpush1.msra.mxu0 %v205
    %463 = vmatprep.subr.mxu0 0.0
    %464 = vmatpush1.msra.mxu0 %v206
    %465 = vmatprep.subr.mxu0 0.0
    %466 = vmatpush1.msra.mxu0 %v207
    %467 = vmatprep.subr.mxu0 0.0
    %468 = vmatpush1.msra.mxu0 %v208
    %469 = vmatprep.subr.mxu0 0.0
    %470 = vmatpush1.msra.mxu0 %v209
    %471 = vmatprep.subr.mxu0 0.0
    %472 = vmatpush1.msra.mxu0 %v210
    %473 = vmatprep.subr.mxu0 0.0
    %474 = vmatpush1.msra.mxu0 %v211
    %475 = vmatprep.subr.mxu0 0.0
    %476 = vmatpush1.msra.mxu0 %v212
    %477 = vmatprep.mubr.f32.mxu0 %v40
    %478 = vmatmul.mubr.f32.gmra.mrb[0].mxu0 %v39
    %v479 = vpop.f32.mrb[0].mxu0
    %v480 = vadd.f32 %v335, %v479
    %v481 = vpop.f32.mrb[0].mxu0
    %482 = vmatprep.mubr.f32.mxu0 %v47
    %483 = vmatmul.mubr.f32.gmra.mrb[0].mxu0 %v46
    %v484 = vpop.f32.mrb[0].mxu0
    %v485 = vadd.f32 %v340, %v484
    %v486 = vpop.f32.mrb[0].mxu0
    %487 = vmatprep.mubr.f32.mxu0 %v54
    %488 = vmatmul.mubr.f32.gmra.mrb[0].mxu0 %v53
    %v489 = vpop.f32.mrb[0].mxu0
    %v490 = vadd.f32 %v345, %v489
    %v491 = vpop.f32.mrb[0].mxu0
    %492 = vmatprep.mubr.f32.mxu0 %v61
    %493 = vmatmul.mubr.f32.gmra.mrb[0].mxu0 %v60
    %v494 = vpop.f32.mrb[0].mxu0
    %v495 = vadd.f32 %v350, %v494
    %v496 = vpop.f32.mrb[0].mxu0
    %497 = vmatprep.mubr.f32.mxu0 %v68
    %498 = vmatmul.mubr.f32.gmra.mrb[0].mxu0 %v67
    %v499 = vpop.f32.mrb[0].mxu0
    %v500 = vadd.f32 %v355, %v499
    %v501 = vpop.f32.mrb[0].mxu0
    %502 = vmatprep.mubr.f32.mxu0 %v75
    %503 = vmatmul.mubr.f32.gmra.mrb[0].mxu0 %v74
    %v504 = vpop.f32.mrb[0].mxu0
    %v505 = vadd.f32 %v360, %v504
    %v506 = vpop.f32.mrb[0].mxu0
    %507 = vmatprep.mubr.f32.mxu0 %v82
    %508 = vmatmul.mubr.f32.gmra.mrb[0].mxu0 %v81
    %v509 = vpop.f32.mrb[0].mxu0
    %v510 = vadd.f32 %v365, %v509
    %v511 = vpop.f32.mrb[0].mxu0
    %512 = vmatprep.mubr.f32.mxu0 %v89
    %513 = vmatmul.mubr.f32.gmra.mrb[0].mxu0 %v88
    %v514 = vpop.f32.mrb[0].mxu0
    %v515 = vadd.f32 %v370, %v514
    %v516 = vpop.f32.mrb[0].mxu0
    %517 = vmatprep.mubr.f32.mxu0 %v96
    %518 = vmatmul.mubr.f32.gmra.mrb[0].mxu0 %v95
    %v519 = vpop.f32.mrb[0].mxu0
    %v520 = vadd.f32 %v375, %v519
    %v521 = vpop.f32.mrb[0].mxu0
    %522 = vmatprep.mubr.f32.mxu0 %v103
    %523 = vmatmul.mubr.f32.gmra.mrb[0].mxu0 %v102
    %v524 = vpop.f32.mrb[0].mxu0
    %v525 = vadd.f32 %v380, %v524
    %v526 = vpop.f32.mrb[0].mxu0
    %527 = vmatprep.mubr.f32.mxu0 %v110
    %528 = vmatmul.mubr.f32.gmra.mrb[0].mxu0 %v109
    %v529 = vpop.f32.mrb[0].mxu0
    %v530 = vadd.f32 %v385, %v529
    %v531 = vpop.f32.mrb[0].mxu0
    %532 = vmatprep.mubr.f32.mxu0 %v117
    %533 = vmatmul.mubr.f32.gmra.mrb[0].mxu0 %v116
    %v534 = vpop.f32.mrb[0].mxu0
    %v535 = vadd.f32 %v390, %v534
    %v536 = vpop.f32.mrb[0].mxu0
    %537 = vmatprep.mubr.f32.mxu0 %v124
    %538 = vmatmul.mubr.f32.gmra.mrb[0].mxu0 %v123
    %v539 = vpop.f32.mrb[0].mxu0
    %v540 = vadd.f32 %v395, %v539
    %v541 = vpop.f32.mrb[0].mxu0
    %542 = vmatprep.mubr.f32.mxu0 %v131
    %543 = vmatmul.mubr.f32.gmra.mrb[0].mxu0 %v130
    %v544 = vpop.f32.mrb[0].mxu0
    %v545 = vadd.f32 %v400, %v544
    %v546 = vpop.f32.mrb[0].mxu0
    %547 = vmatprep.mubr.f32.mxu0 %v138
    %548 = vmatmul.mubr.f32.gmra.mrb[0].mxu0 %v137
    %v549 = vpop.f32.mrb[0].mxu0
    %v550 = vadd.f32 %v405, %v549
    %v551 = vpop.f32.mrb[0].mxu0
    %552 = vmatprep.mubr.f32.mxu0 %v145
    %553 = vmatmul.mubr.f32.gmra.mrb[0].mxu0 %v144
    %v554 = vpop.f32.mrb[0].mxu0
    %v555 = vadd.f32 %v410, %v554
    %v556 = vpop.f32.mrb[0].mxu0
    %557 = vdwg.mxu0
    %558 = vmatprep.subr.mxu0 0.0
    %559 = vmatpush1.msra.mxu0 %v213
    %560 = vmatprep.subr.mxu0 0.0
    %561 = vmatpush1.msra.mxu0 %v214
    %562 = vmatprep.subr.mxu0 0.0
    %563 = vmatpush1.msra.mxu0 %v215
    %564 = vmatprep.subr.mxu0 0.0
    %565 = vmatpush1.msra.mxu0 %v216
    %566 = vmatprep.subr.mxu0 0.0
    %567 = vmatpush1.msra.mxu0 %v217
    %568 = vmatprep.subr.mxu0 0.0
    %569 = vmatpush1.msra.mxu0 %v218
    %570 = vmatprep.subr.mxu0 0.0
    %571 = vmatpush1.msra.mxu0 %v219
    %572 = vmatprep.subr.mxu0 0.0
    %573 = vmatpush1.msra.mxu0 %v220
    %574 = vmatprep.subr.mxu0 0.0
    %575 = vmatpush1.msra.mxu0 %v221
    %576 = vmatprep.subr.mxu0 0.0
    %577 = vmatpush1.msra.mxu0 %v222
    %578 = vmatprep.subr.mxu0 0.0
    %579 = vmatpush1.msra.mxu0 %v223
    %580 = vmatprep.subr.mxu0 0.0
    %581 = vmatpush1.msra.mxu0 %v224
    %582 = vmatprep.subr.mxu0 0.0
    %583 = vmatpush1.msra.mxu0 %v225
    %584 = vmatprep.subr.mxu0 0.0
    %585 = vmatpush1.msra.mxu0 %v226
    %586 = vmatprep.subr.mxu0 0.0
    %587 = vmatpush1.msra.mxu0 %v227
    %588 = vmatprep.subr.mxu0 0.0
    %589 = vmatpush1.msra.mxu0 %v228
    %590 = vmatprep.subr.mxu0 0.0
    %591 = vmatpush1.msra.mxu0 %v229
    %592 = vmatprep.subr.mxu0 0.0
    %593 = vmatpush1.msra.mxu0 %v230
    %594 = vmatprep.subr.mxu0 0.0
    %595 = vmatpush1.msra.mxu0 %v231
    %596 = vmatprep.subr.mxu0 0.0
    %597 = vmatpush1.msra.mxu0 %v232
    %598 = vmatprep.subr.mxu0 0.0
    %599 = vmatpush1.msra.mxu0 %v233
    %600 = vmatprep.subr.mxu0 0.0
    %601 = vmatpush1.msra.mxu0 %v234
    %602 = vmatprep.subr.mxu0 0.0
    %603 = vmatpush1.msra.mxu0 %v235
    %604 = vmatprep.subr.mxu0 0.0
    %605 = vmatpush1.msra.mxu0 %v236
    %606 = vmatprep.subr.mxu0 0.0
    %607 = vmatpush1.msra.mxu0 %v237
    %608 = vmatprep.subr.mxu0 0.0
    %609 = vmatpush1.msra.mxu0 %v238
    %610 = vmatprep.subr.mxu0 0.0
    %611 = vmatpush1.msra.mxu0 %v239
    %612 = vmatprep.subr.mxu0 0.0
    %613 = vmatpush1.msra.mxu0 %v240
    %614 = vmatprep.subr.mxu0 0.0
    %615 = vmatpush1.msra.mxu0 %v241
    %616 = vmatprep.subr.mxu0 0.0
    %617 = vmatpush1.msra.mxu0 %v242
    %618 = vmatprep.subr.mxu0 0.0
    %619 = vmatpush1.msra.mxu0 %v243
    %620 = vmatprep.subr.mxu0 0.0
    %621 = vmatpush1.msra.mxu0 %v244
    %622 = vmatprep.mubr.f32.mxu0 %v42
    %623 = vmatmul.mubr.f32.gmra.mrb[0].mxu0 %v41
    %v624 = vpop.f32.mrb[0].mxu0
    %v625 = vadd.f32 %v480, %v624
    %v626 = vpop.f32.mrb[0].mxu0
    %627 = vmatprep.mubr.f32.mxu0 %v49
    %628 = vmatmul.mubr.f32.gmra.mrb[0].mxu0 %v48
    %v629 = vpop.f32.mrb[0].mxu0
    %v630 = vadd.f32 %v485, %v629
    %v631 = vpop.f32.mrb[0].mxu0
    %632 = vmatprep.mubr.f32.mxu0 %v56
    %633 = vmatmul.mubr.f32.gmra.mrb[0].mxu0 %v55
    %v634 = vpop.f32.mrb[0].mxu0
    %v635 = vadd.f32 %v490, %v634
    %v636 = vpop.f32.mrb[0].mxu0
    %637 = vmatprep.mubr.f32.mxu0 %v63
    %638 = vmatmul.mubr.f32.gmra.mrb[0].mxu0 %v62
    %v639 = vpop.f32.mrb[0].mxu0
    %v640 = vadd.f32 %v495, %v639
    %v641 = vpop.f32.mrb[0].mxu0
    %642 = vmatprep.mubr.f32.mxu0 %v70
    %643 = vmatmul.mubr.f32.gmra.mrb[0].mxu0 %v69
    %v644 = vpop.f32.mrb[0].mxu0
    %v645 = vadd.f32 %v500, %v644
    %v646 = vpop.f32.mrb[0].mxu0
    %647 = vmatprep.mubr.f32.mxu0 %v77
    %648 = vmatmul.mubr.f32.gmra.mrb[0].mxu0 %v76
    %v649 = vpop.f32.mrb[0].mxu0
    %v650 = vadd.f32 %v505, %v649
    %v651 = vpop.f32.mrb[0].mxu0
    %652 = vmatprep.mubr.f32.mxu0 %v84
    %653 = vmatmul.mubr.f32.gmra.mrb[0].mxu0 %v83
    %v654 = vpop.f32.mrb[0].mxu0
    %v655 = vadd.f32 %v510, %v654
    %v656 = vpop.f32.mrb[0].mxu0
    %657 = vmatprep.mubr.f32.mxu0 %v91
    %658 = vmatmul.mubr.f32.gmra.mrb[0].mxu0 %v90
    %v659 = vpop.f32.mrb[0].mxu0
    %v660 = vadd.f32 %v515, %v659
    %v661 = vpop.f32.mrb[0].mxu0
    %662 = vmatprep.mubr.f32.mxu0 %v98
    %663 = vmatmul.mubr.f32.gmra.mrb[0].mxu0 %v97
    %v664 = vpop.f32.mrb[0].mxu0
    %v665 = vadd.f32 %v520, %v664
    %v666 = vpop.f32.mrb[0].mxu0
    %667 = vmatprep.mubr.f32.mxu0 %v105
    %668 = vmatmul.mubr.f32.gmra.mrb[0].mxu0 %v104
    %v669 = vpop.f32.mrb[0].mxu0
    %v670 = vadd.f32 %v525, %v669
    %v671 = vpop.f32.mrb[0].mxu0
    %672 = vmatprep.mubr.f32.mxu0 %v112
    %673 = vmatmul.mubr.f32.gmra.mrb[0].mxu0 %v111
    %v674 = vpop.f32.mrb[0].mxu0
    %v675 = vadd.f32 %v530, %v674
    %v676 = vpop.f32.mrb[0].mxu0
    %677 = vmatprep.mubr.f32.mxu0 %v119
    %678 = vmatmul.mubr.f32.gmra.mrb[0].mxu0 %v118
    %v679 = vpop.f32.mrb[0].mxu0
    %v680 = vadd.f32 %v535, %v679
    %v681 = vpop.f32.mrb[0].mxu0
    %682 = vmatprep.mubr.f32.mxu0 %v126
    %683 = vmatmul.mubr.f32.gmra.mrb[0].mxu0 %v125
    %v684 = vpop.f32.mrb[0].mxu0
    %v685 = vadd.f32 %v540, %v684
    %v686 = vpop.f32.mrb[0].mxu0
    %687 = vmatprep.mubr.f32.mxu0 %v133
    %688 = vmatmul.mubr.f32.gmra.mrb[0].mxu0 %v132
    %v689 = vpop.f32.mrb[0].mxu0
    %v690 = vadd.f32 %v545, %v689
    %v691 = vpop.f32.mrb[0].mxu0
    %692 = vmatprep.mubr.f32.mxu0 %v140
    %693 = vmatmul.mubr.f32.gmra.mrb[0].mxu0 %v139
    %v694 = vpop.f32.mrb[0].mxu0
    %v695 = vadd.f32 %v550, %v694
    %v696 = vpop.f32.mrb[0].mxu0
    %697 = vmatprep.mubr.f32.mxu0 %v147
    %698 = vmatmul.mubr.f32.gmra.mrb[0].mxu0 %v146
    %v699 = vpop.f32.mrb[0].mxu0
    %v700 = vadd.f32 %v555, %v699
    %v701 = vpop.f32.mrb[0].mxu0
    %702 = vdwg.mxu0
    %703 = vmatprep.subr.mxu0 0.0
    %704 = vmatpush1.msra.mxu0 %v245
    %705 = vmatprep.subr.mxu0 0.0
    %706 = vmatpush1.msra.mxu0 %v246
    %707 = vmatprep.subr.mxu0 0.0
    %708 = vmatpush1.msra.mxu0 %v247
    %709 = vmatprep.subr.mxu0 0.0
    %710 = vmatpush1.msra.mxu0 %v248
    %711 = vmatprep.subr.mxu0 0.0
    %712 = vmatpush1.msra.mxu0 %v249
    %713 = vmatprep.subr.mxu0 0.0
    %714 = vmatpush1.msra.mxu0 %v250
    %715 = vmatprep.subr.mxu0 0.0
    %716 = vmatpush1.msra.mxu0 %v251
    %717 = vmatprep.subr.mxu0 0.0
    %718 = vmatpush1.msra.mxu0 %v252
    %719 = vmatprep.subr.mxu0 0.0
    %720 = vmatpush1.msra.mxu0 %v253
    %721 = vmatprep.subr.mxu0 0.0
    %722 = vmatpush1.msra.mxu0 %v254
    %723 = vmatprep.subr.mxu0 0.0
    %724 = vmatpush1.msra.mxu0 %v255
    %725 = vmatprep.subr.mxu0 0.0
    %726 = vmatpush1.msra.mxu0 %v256
    %727 = vmatprep.subr.mxu0 0.0
    %728 = vmatpush1.msra.mxu0 %v257
    %729 = vmatprep.subr.mxu0 0.0
    %730 = vmatpush1.msra.mxu0 %v258
    %731 = vmatprep.subr.mxu0 0.0
    %732 = vmatpush1.msra.mxu0 %v259
    %733 = vmatprep.subr.mxu0 0.0
    %734 = vmatpush1.msra.mxu0 %v260
    %735 = vmatprep.subr.mxu0 0.0
    %736 = vmatpush1.msra.mxu0 0.0
    %737 = vmatprep.subr.mxu0 0.0
    %738 = vmatpush1.msra.mxu0 0.0
    %739 = vmatprep.subr.mxu0 0.0
    %740 = vmatpush1.msra.mxu0 0.0
    %741 = vmatprep.subr.mxu0 0.0
    %742 = vmatpush1.msra.mxu0 0.0
    %743 = vmatprep.subr.mxu0 0.0
    %744 = vmatpush1.msra.mxu0 0.0
    %745 = vmatprep.subr.mxu0 0.0
    %746 = vmatpush1.msra.mxu0 0.0
    %747 = vmatprep.subr.mxu0 0.0
    %748 = vmatpush1.msra.mxu0 0.0
    %749 = vmatprep.subr.mxu0 0.0
    %750 = vmatpush1.msra.mxu0 0.0
    %751 = vmatprep.subr.mxu0 0.0
    %752 = vmatpush1.msra.mxu0 0.0
    %753 = vmatprep.subr.mxu0 0.0
    %754 = vmatpush1.msra.mxu0 0.0
    %755 = vmatprep.subr.mxu0 0.0
    %756 = vmatpush1.msra.mxu0 0.0
    %757 = vmatprep.subr.mxu0 0.0
    %758 = vmatpush1.msra.mxu0 0.0
    %759 = vmatprep.subr.mxu0 0.0
    %760 = vmatpush1.msra.mxu0 0.0
    %761 = vmatprep.subr.mxu0 0.0
    %762 = vmatpush1.msra.mxu0 0.0
    %763 = vmatprep.subr.mxu0 0.0
    %764 = vmatpush1.msra.mxu0 0.0
    %765 = vmatprep.subr.mxu0 0.0
    %766 = vmatpush1.msra.mxu0 0.0
    %767 = vmatprep.mubr.f32.mxu0 0.0
    %768 = vmatmul.mubr.f32.gmra.mrb[0].mxu0 %v43
    %v769 = vpop.f32.mrb[0].mxu0
    %v770 = vadd.f32 %v625, %v769
    %v771 = vpop.f32.mrb[0].mxu0
    %772 = vmatprep.mubr.f32.mxu0 0.0
    %773 = vmatmul.mubr.f32.gmra.mrb[0].mxu0 %v50
    %v774 = vpop.f32.mrb[0].mxu0
    %v775 = vadd.f32 %v630, %v774
    %v776 = vpop.f32.mrb[0].mxu0
    %777 = vmatprep.mubr.f32.mxu0 0.0
    %778 = vmatmul.mubr.f32.gmra.mrb[0].mxu0 %v57
    %v779 = vpop.f32.mrb[0].mxu0
    %v780 = vadd.f32 %v635, %v779
    %v781 = vpop.f32.mrb[0].mxu0
    %782 = vmatprep.mubr.f32.mxu0 0.0
    %783 = vmatmul.mubr.f32.gmra.mrb[0].mxu0 %v64
    %v784 = vpop.f32.mrb[0].mxu0
    %v785 = vadd.f32 %v640, %v784
    %v786 = vpop.f32.mrb[0].mxu0
    %787 = vmatprep.mubr.f32.mxu0 0.0
    %788 = vmatmul.mubr.f32.gmra.mrb[0].mxu0 %v71
    %v789 = vpop.f32.mrb[0].mxu0
    %v790 = vadd.f32 %v645, %v789
    %v791 = vpop.f32.mrb[0].mxu0
    %792 = vmatprep.mubr.f32.mxu0 0.0
    %793 = vmatmul.mubr.f32.gmra.mrb[0].mxu0 %v78
    %v794 = vpop.f32.mrb[0].mxu0
    %v795 = vadd.f32 %v650, %v794
    %v796 = vpop.f32.mrb[0].mxu0
    %797 = vmatprep.mubr.f32.mxu0 0.0
    %798 = vmatmul.mubr.f32.gmra.mrb[0].mxu0 %v85
    %v799 = vpop.f32.mrb[0].mxu0
    %v800 = vadd.f32 %v655, %v799
    %v801 = vpop.f32.mrb[0].mxu0
    %802 = vmatprep.mubr.f32.mxu0 0.0
    %803 = vmatmul.mubr.f32.gmra.mrb[0].mxu0 %v92
    %v804 = vpop.f32.mrb[0].mxu0
    %v805 = vadd.f32 %v660, %v804
    %v806 = vpop.f32.mrb[0].mxu0
    %807 = vmatprep.mubr.f32.mxu0 0.0
    %808 = vmatmul.mubr.f32.gmra.mrb[0].mxu0 %v99
    %v809 = vpop.f32.mrb[0].mxu0
    %v810 = vadd.f32 %v665, %v809
    %v811 = vpop.f32.mrb[0].mxu0
    %812 = vmatprep.mubr.f32.mxu0 0.0
    %813 = vmatmul.mubr.f32.gmra.mrb[0].mxu0 %v106
    %v814 = vpop.f32.mrb[0].mxu0
    %v815 = vadd.f32 %v670, %v814
    %v816 = vpop.f32.mrb[0].mxu0
    %817 = vmatprep.mubr.f32.mxu0 0.0
    %818 = vmatmul.mubr.f32.gmra.mrb[0].mxu0 %v113
    %v819 = vpop.f32.mrb[0].mxu0
    %v820 = vadd.f32 %v675, %v819
    %v821 = vpop.f32.mrb[0].mxu0
    %822 = vmatprep.mubr.f32.mxu0 0.0
    %823 = vmatmul.mubr.f32.gmra.mrb[0].mxu0 %v120
    %v824 = vpop.f32.mrb[0].mxu0
    %v825 = vadd.f32 %v680, %v824
    %v826 = vpop.f32.mrb[0].mxu0
    %827 = vmatprep.mubr.f32.mxu0 0.0
    %828 = vmatmul.mubr.f32.gmra.mrb[0].mxu0 %v127
    %v829 = vpop.f32.mrb[0].mxu0
    %v830 = vadd.f32 %v685, %v829
    %v831 = vpop.f32.mrb[0].mxu0
    %832 = vmatprep.mubr.f32.mxu0 0.0
    %833 = vmatmul.mubr.f32.gmra.mrb[0].mxu0 %v134
    %v834 = vpop.f32.mrb[0].mxu0
    %v835 = vadd.f32 %v690, %v834
    %v836 = vpop.f32.mrb[0].mxu0
    %837 = vmatprep.mubr.f32.mxu0 0.0
    %838 = vmatmul.mubr.f32.gmra.mrb[0].mxu0 %v141
    %v839 = vpop.f32.mrb[0].mxu0
    %v840 = vadd.f32 %v695, %v839
    %v841 = vpop.f32.mrb[0].mxu0
    %842 = vmatprep.mubr.f32.mxu0 0.0
    %843 = vmatmul.mubr.f32.gmra.mrb[0].mxu0 %v148
    %v844 = vpop.f32.mrb[0].mxu0
    %v845 = vadd.f32 %v700, %v844
    %v846 = vpop.f32.mrb[0].mxu0
    %847 = vdwg.mxu0
    %v848 = vmax.f32 %v770, 0.0
    %v849 = vmax.f32 %v775, 0.0
    %v850 = vmax.f32 %v780, 0.0
    %v851 = vmax.f32 %v785, 0.0
    %v852 = vmax.f32 %v790, 0.0
    %v853 = vmax.f32 %v795, 0.0
    %v854 = vmax.f32 %v800, 0.0
    %v855 = vmax.f32 %v805, 0.0
    %v856 = vmax.f32 %v810, 0.0
    %v857 = vmax.f32 %v815, 0.0
    %v858 = vmax.f32 %v820, 0.0
    %v859 = vmax.f32 %v825, 0.0
    %v860 = vmax.f32 %v830, 0.0
    %v861 = vmax.f32 %v835, 0.0
    %v862 = vmax.f32 %v840, 0.0
    %v863 = vmax.f32 %v845, 0.0
    %864 = vst [vmem:[#allocation2] sm:$0xff] 0.0
    %865 = vst [vmem:[#allocation2 + $0x8] sm:$0xff] 0.0
    %866 = vst [vmem:[#allocation2 + $0x10] sm:$0xff] 0.0
    %867 = vst [vmem:[#allocation2 + $0x18] sm:$0xff] 0.0
    %868 = vst [vmem:[#allocation2 + $0x20] sm:$0xff] 0.0
    %869 = vst [vmem:[#allocation2 + $0x28] sm:$0xff] 0.0
    %870 = vst [vmem:[#allocation2 + $0x30] sm:$0xff] 0.0
    %871 = vst [vmem:[#allocation2 + $0x38] sm:$0xff] 0.0
    %872 = vst [vmem:[#allocation2 + $0x40] sm:$0xff] 0.0
    %873 = vst [vmem:[#allocation2 + $0x48] sm:$0xff] 0.0
    %874 = vst [vmem:[#allocation2 + $0x50] sm:$0xff] 0.0
    %875 = vst [vmem:[#allocation2 + $0x58] sm:$0xff] 0.0
    %876 = vst [vmem:[#allocation2 + $0x60] sm:$0xff] 0.0
    %877 = vst [vmem:[#allocation2 + $0x68] sm:$0xff] 0.0
    %878 = vst [vmem:[#allocation2 + $0x70] sm:$0xff] 0.0
    %879 = vst [vmem:[#allocation2 + $0x78] sm:$0xff] 0.0
    %v880 = vld [vmem:[#allocation3] sm:$0xff]
    %v881 = vld [vmem:[#allocation3 + $0x8] sm:$0xff]
    %v882 = vld [vmem:[#allocation3 + $0x10] sm:$0xff]
    %v883 = vld [vmem:[#allocation3 + $0x18] sm:$0xff]
    %v884 = vld [vmem:[#allocation3 + $0x20] sm:$0xff]
    %v885 = vld [vmem:[#allocation3 + $0x28] sm:$0xff]
    %v886 = vld [vmem:[#allocation3 + $0x30] sm:$0xff]
    %v887 = vld [vmem:[#allocation3 + $0x38] sm:$0xff]
    %v888 = vld [vmem:[#allocation3 + $0x40] sm:$0xff]
    %v889 = vld [vmem:[#allocation3 + $0x48] sm:$0xff]
    %v890 = vld [vmem:[#allocation3 + $0x50] sm:$0xff]
    %v891 = vld [vmem:[#allocation3 + $0x58] sm:$0xff]
    %v892 = vld [vmem:[#allocation3 + $0x60] sm:$0xff]
    %v893 = vld [vmem:[#allocation3 + $0x68] sm:$0xff]
    %v894 = vld [vmem:[#allocation3 + $0x70] sm:$0xff]
    %v895 = vld [vmem:[#allocation3 + $0x78] sm:$0xff]
    %896 = vmatprep.subr.mxu0 0.0
    %897 = vmatpush1.msra.mxu0 %v848
    %898 = vmatprep.subr.mxu0 0.0
    %899 = vmatpush1.msra.mxu0 %v849
    %900 = vmatprep.subr.mxu0 0.0
    %901 = vmatpush1.msra.mxu0 %v850
    %902 = vmatprep.subr.mxu0 0.0
    %903 = vmatpush1.msra.mxu0 %v851
    %904 = vmatprep.subr.mxu0 0.0
    %905 = vmatpush1.msra.mxu0 %v852
    %906 = vmatprep.subr.mxu0 0.0
    %907 = vmatpush1.msra.mxu0 %v853
    %908 = vmatprep.subr.mxu0 0.0
    %909 = vmatpush1.msra.mxu0 %v854
    %910 = vmatprep.subr.mxu0 0.0
    %911 = vmatpush1.msra.mxu0 %v855
    %912 = vmatprep.subr.mxu0 0.0
    %913 = vmatpush1.msra.mxu0 %v856
    %914 = vmatprep.subr.mxu0 0.0
    %915 = vmatpush1.msra.mxu0 %v857
    %916 = vmatprep.subr.mxu0 0.0
    %917 = vmatpush1.msra.mxu0 %v858
    %918 = vmatprep.subr.mxu0 0.0
    %919 = vmatpush1.msra.mxu0 %v859
    %920 = vmatprep.subr.mxu0 0.0
    %921 = vmatpush1.msra.mxu0 %v860
    %922 = vmatprep.subr.mxu0 0.0
    %923 = vmatpush1.msra.mxu0 %v861
    %924 = vmatprep.subr.mxu0 0.0
    %925 = vmatpush1.msra.mxu0 %v862
    %926 = vmatprep.subr.mxu0 0.0
    %927 = vmatpush1.msra.mxu0 %v863
    %928 = vmatprep.subr.mxu0 0.0
    %929 = vmatpush1.msra.mxu0 0.0
    %930 = vmatprep.subr.mxu0 0.0
    %931 = vmatpush1.msra.mxu0 0.0
    %932 = vmatprep.subr.mxu0 0.0
    %933 = vmatpush1.msra.mxu0 0.0
    %934 = vmatprep.subr.mxu0 0.0
    %935 = vmatpush1.msra.mxu0 0.0
    %936 = vmatprep.subr.mxu0 0.0
    %937 = vmatpush1.msra.mxu0 0.0
    %938 = vmatprep.subr.mxu0 0.0
    %939 = vmatpush1.msra.mxu0 0.0
    %940 = vmatprep.subr.mxu0 0.0
    %941 = vmatpush1.msra.mxu0 0.0
    %942 = vmatprep.subr.mxu0 0.0
    %943 = vmatpush1.msra.mxu0 0.0
    %944 = vmatprep.subr.mxu0 0.0
    %945 = vmatpush1.msra.mxu0 0.0
    %946 = vmatprep.subr.mxu0 0.0
    %947 = vmatpush1.msra.mxu0 0.0
    %948 = vmatprep.subr.mxu0 0.0
    %949 = vmatpush1.msra.mxu0 0.0
    %950 = vmatprep.subr.mxu0 0.0
    %951 = vmatpush1.msra.mxu0 0.0
    %952 = vmatprep.subr.mxu0 0.0
    %953 = vmatpush1.msra.mxu0 0.0
    %954 = vmatprep.subr.mxu0 0.0
    %955 = vmatpush1.msra.mxu0 0.0
    %956 = vmatprep.subr.mxu0 0.0
    %957 = vmatpush1.msra.mxu0 0.0
    %958 = vmatprep.subr.mxu0 0.0
    %959 = vmatpush1.msra.mxu0 0.0
    %960 = vmatprep.mubr.f32.mxu0 0.0
    %961 = vmatmul.mubr.f32.gmra.mrb[0].mxu0 %v880
    %v962 = vpop.f32.mrb[0].mxu0
    %v963 = vadd.f32 0.0, %v962
    %v964 = vpop.f32.mrb[0].mxu0
    %965 = vmatprep.mubr.f32.mxu0 0.0
    %966 = vmatmul.mubr.f32.gmra.mrb[0].mxu0 %v881
    %v967 = vpop.f32.mrb[0].mxu0
    %v968 = vadd.f32 0.0, %v967
    %v969 = vpop.f32.mrb[0].mxu0
    %970 = vmatprep.mubr.f32.mxu0 0.0
    %971 = vmatmul.mubr.f32.gmra.mrb[0].mxu0 %v882
    %v972 = vpop.f32.mrb[0].mxu0
    %v973 = vadd.f32 0.0, %v972
    %v974 = vpop.f32.mrb[0].mxu0
    %975 = vmatprep.mubr.f32.mxu0 0.0
    %976 = vmatmul.mubr.f32.gmra.mrb[0].mxu0 %v883
    %v977 = vpop.f32.mrb[0].mxu0
    %v978 = vadd.f32 0.0, %v977
    %v979 = vpop.f32.mrb[0].mxu0
    %980 = vmatprep.mubr.f32.mxu0 0.0
    %981 = vmatmul.mubr.f32.gmra.mrb[0].mxu0 %v884
    %v982 = vpop.f32.mrb[0].mxu0
    %v983 = vadd.f32 0.0, %v982
    %v984 = vpop.f32.mrb[0].mxu0
    %985 = vmatprep.mubr.f32.mxu0 0.0
    %986 = vmatmul.mubr.f32.gmra.mrb[0].mxu0 %v885
    %v987 = vpop.f32.mrb[0].mxu0
    %v988 = vadd.f32 0.0, %v987
    %v989 = vpop.f32.mrb[0].mxu0
    %990 = vmatprep.mubr.f32.mxu0 0.0
    %991 = vmatmul.mubr.f32.gmra.mrb[0].mxu0 %v886
    %v992 = vpop.f32.mrb[0].mxu0
    %v993 = vadd.f32 0.0, %v992
    %v994 = vpop.f32.mrb[0].mxu0
    %995 = vmatprep.mubr.f32.mxu0 0.0
    %996 = vmatmul.mubr.f32.gmra.mrb[0].mxu0 %v887
    %v997 = vpop.f32.mrb[0].mxu0
    %v998 = vadd.f32 0.0, %v997
    %v999 = vpop.f32.mrb[0].mxu0
    %1000 = vmatprep.mubr.f32.mxu0 0.0
    %1001 = vmatmul.mubr.f32.gmra.mrb[0].mxu0 %v888
    %v1002 = vpop.f32.mrb[0].mxu0
    %v1003 = vadd.f32 0.0, %v1002
    %v1004 = vpop.f32.mrb[0].mxu0
    %1005 = vmatprep.mubr.f32.mxu0 0.0
    %1006 = vmatmul.mubr.f32.gmra.mrb[0].mxu0 %v889
    %v1007 = vpop.f32.mrb[0].mxu0
    %v1008 = vadd.f32 0.0, %v1007
    %v1009 = vpop.f32.mrb[0].mxu0
    %1010 = vmatprep.mubr.f32.mxu0 0.0
    %1011 = vmatmul.mubr.f32.gmra.mrb[0].mxu0 %v890
    %v1012 = vpop.f32.mrb[0].mxu0
    %v1013 = vadd.f32 0.0, %v1012
    %v1014 = vpop.f32.mrb[0].mxu0
    %1015 = vmatprep.mubr.f32.mxu0 0.0
    %1016 = vmatmul.mubr.f32.gmra.mrb[0].mxu0 %v891
    %v1017 = vpop.f32.mrb[0].mxu0
    %v1018 = vadd.f32 0.0, %v1017
    %v1019 = vpop.f32.mrb[0].mxu0
    %1020 = vmatprep.mubr.f32.mxu0 0.0
    %1021 = vmatmul.mubr.f32.gmra.mrb[0].mxu0 %v892
    %v1022 = vpop.f32.mrb[0].mxu0
    %v1023 = vadd.f32 0.0, %v1022
    %v1024 = vpop.f32.mrb[0].mxu0
    %1025 = vmatprep.mubr.f32.mxu0 0.0
    %1026 = vmatmul.mubr.f32.gmra.mrb[0].mxu0 %v893
    %v1027 = vpop.f32.mrb[0].mxu0
    %v1028 = vadd.f32 0.0, %v1027
    %v1029 = vpop.f32.mrb[0].mxu0
    %1030 = vmatprep.mubr.f32.mxu0 0.0
    %1031 = vmatmul.mubr.f32.gmra.mrb[0].mxu0 %v894
    %v1032 = vpop.f32.mrb[0].mxu0
    %v1033 = vadd.f32 0.0, %v1032
    %v1034 = vpop.f32.mrb[0].mxu0
    %1035 = vmatprep.mubr.f32.mxu0 0.0
    %1036 = vmatmul.mubr.f32.gmra.mrb[0].mxu0 %v895
    %v1037 = vpop.f32.mrb[0].mxu0
    %v1038 = vadd.f32 0.0, %v1037
    %v1039 = vpop.f32.mrb[0].mxu0
    %1040 = vdwg.mxu0
    %vm1041 = vcmask 130048
    %1042 = vst.msk [vmem:[#allocation2] sm:$0xff] %vm1041, %v963
    %1043 = vst.msk [vmem:[#allocation2 + $0x8] sm:$0xff] %vm1041, %v968
    %1044 = vst.msk [vmem:[#allocation2 + $0x10] sm:$0xff] %vm1041, %v973
    %1045 = vst.msk [vmem:[#allocation2 + $0x18] sm:$0xff] %vm1041, %v978
    %1046 = vst.msk [vmem:[#allocation2 + $0x20] sm:$0xff] %vm1041, %v983
    %1047 = vst.msk [vmem:[#allocation2 + $0x28] sm:$0xff] %vm1041, %v988
    %1048 = vst.msk [vmem:[#allocation2 + $0x30] sm:$0xff] %vm1041, %v993
    %1049 = vst.msk [vmem:[#allocation2 + $0x38] sm:$0xff] %vm1041, %v998
    %1050 = vst.msk [vmem:[#allocation2 + $0x40] sm:$0xff] %vm1041, %v1003
    %1051 = vst.msk [vmem:[#allocation2 + $0x48] sm:$0xff] %vm1041, %v1008
    %1052 = vst.msk [vmem:[#allocation2 + $0x50] sm:$0xff] %vm1041, %v1013
    %1053 = vst.msk [vmem:[#allocation2 + $0x58] sm:$0xff] %vm1041, %v1018
    %1054 = vst.msk [vmem:[#allocation2 + $0x60] sm:$0xff] %vm1041, %v1023
    %1055 = vst.msk [vmem:[#allocation2 + $0x68] sm:$0xff] %vm1041, %v1028
    %1056 = vst.msk [vmem:[#allocation2 + $0x70] sm:$0xff] %vm1041, %v1033
    %1057 = vst.msk [vmem:[#allocation2 + $0x78] sm:$0xff] %vm1041, %v1038
    %s1058 = scalar_lea.vmem [#allocation3], 128
    %v1059 = vld [vmem:[%s1058] sm:$0xff]
    %v1060 = vld [vmem:[%s1058 + $0x8] sm:$0xff]
    %v1061 = vld [vmem:[%s1058 + $0x10] sm:$0xff]
    %v1062 = vld [vmem:[%s1058 + $0x18] sm:$0xff]
    %v1063 = vld [vmem:[%s1058 + $0x20] sm:$0xff]
    %v1064 = vld [vmem:[%s1058 + $0x28] sm:$0xff]
    %v1065 = vld [vmem:[%s1058 + $0x30] sm:$0xff]
    %v1066 = vld [vmem:[%s1058 + $0x38] sm:$0xff]
    %v1067 = vld [vmem:[%s1058 + $0x40] sm:$0xff]
    %v1068 = vld [vmem:[%s1058 + $0x48] sm:$0xff]
    %v1069 = vld [vmem:[%s1058 + $0x50] sm:$0xff]
    %v1070 = vld [vmem:[%s1058 + $0x58] sm:$0xff]
    %v1071 = vld [vmem:[%s1058 + $0x60] sm:$0xff]
    %v1072 = vld [vmem:[%s1058 + $0x68] sm:$0xff]
    %v1073 = vld [vmem:[%s1058 + $0x70] sm:$0xff]
    %v1074 = vld [vmem:[%s1058 + $0x78] sm:$0xff]
    %1075 = vmatprep.subr.mxu0 0.0
    %1076 = vmatpush1.msra.mxu0 %v848
    %1077 = vmatprep.subr.mxu0 0.0
    %1078 = vmatpush1.msra.mxu0 %v849
    %1079 = vmatprep.subr.mxu0 0.0
    %1080 = vmatpush1.msra.mxu0 %v850
    %1081 = vmatprep.subr.mxu0 0.0
    %1082 = vmatpush1.msra.mxu0 %v851
    %1083 = vmatprep.subr.mxu0 0.0
    %1084 = vmatpush1.msra.mxu0 %v852
    %1085 = vmatprep.subr.mxu0 0.0
    %1086 = vmatpush1.msra.mxu0 %v853
    %1087 = vmatprep.subr.mxu0 0.0
    %1088 = vmatpush1.msra.mxu0 %v854
    %1089 = vmatprep.subr.mxu0 0.0
    %1090 = vmatpush1.msra.mxu0 %v855
    %1091 = vmatprep.subr.mxu0 0.0
    %1092 = vmatpush1.msra.mxu0 %v856
    %1093 = vmatprep.subr.mxu0 0.0
    %1094 = vmatpush1.msra.mxu0 %v857
    %1095 = vmatprep.subr.mxu0 0.0
    %1096 = vmatpush1.msra.mxu0 %v858
    %1097 = vmatprep.subr.mxu0 0.0
    %1098 = vmatpush1.msra.mxu0 %v859
    %1099 = vmatprep.subr.mxu0 0.0
    %1100 = vmatpush1.msra.mxu0 %v860
    %1101 = vmatprep.subr.mxu0 0.0
    %1102 = vmatpush1.msra.mxu0 %v861
    %1103 = vmatprep.subr.mxu0 0.0
    %1104 = vmatpush1.msra.mxu0 %v862
    %1105 = vmatprep.subr.mxu0 0.0
    %1106 = vmatpush1.msra.mxu0 %v863
    %1107 = vmatprep.subr.mxu0 0.0
    %1108 = vmatpush1.msra.mxu0 0.0
    %1109 = vmatprep.subr.mxu0 0.0
    %1110 = vmatpush1.msra.mxu0 0.0
    %1111 = vmatprep.subr.mxu0 0.0
    %1112 = vmatpush1.msra.mxu0 0.0
    %1113 = vmatprep.subr.mxu0 0.0
    %1114 = vmatpush1.msra.mxu0 0.0
    %1115 = vmatprep.subr.mxu0 0.0
    %1116 = vmatpush1.msra.mxu0 0.0
    %1117 = vmatprep.subr.mxu0 0.0
    %1118 = vmatpush1.msra.mxu0 0.0
    %1119 = vmatprep.subr.mxu0 0.0
    %1120 = vmatpush1.msra.mxu0 0.0
    %1121 = vmatprep.subr.mxu0 0.0
    %1122 = vmatpush1.msra.mxu0 0.0
    %1123 = vmatprep.subr.mxu0 0.0
    %1124 = vmatpush1.msra.mxu0 0.0
    %1125 = vmatprep.subr.mxu0 0.0
    %1126 = vmatpush1.msra.mxu0 0.0
    %1127 = vmatprep.subr.mxu0 0.0
    %1128 = vmatpush1.msra.mxu0 0.0
    %1129 = vmatprep.subr.mxu0 0.0
    %1130 = vmatpush1.msra.mxu0 0.0
    %1131 = vmatprep.subr.mxu0 0.0
    %1132 = vmatpush1.msra.mxu0 0.0
    %1133 = vmatprep.subr.mxu0 0.0
    %1134 = vmatpush1.msra.mxu0 0.0
    %1135 = vmatprep.subr.mxu0 0.0
    %1136 = vmatpush1.msra.mxu0 0.0
    %1137 = vmatprep.subr.mxu0 0.0
    %1138 = vmatpush1.msra.mxu0 0.0
    %1139 = vmatprep.mubr.f32.mxu0 0.0
    %1140 = vmatmul.mubr.f32.gmra.mrb[0].mxu0 %v1059
    %v1141 = vpop.f32.mrb[0].mxu0
    %v1142 = vadd.f32 0.0, %v1141
    %v1143 = vpop.f32.mrb[0].mxu0
    %1144 = vmatprep.mubr.f32.mxu0 0.0
    %1145 = vmatmul.mubr.f32.gmra.mrb[0].mxu0 %v1060
    %v1146 = vpop.f32.mrb[0].mxu0
    %v1147 = vadd.f32 0.0, %v1146
    %v1148 = vpop.f32.mrb[0].mxu0
    %1149 = vmatprep.mubr.f32.mxu0 0.0
    %1150 = vmatmul.mubr.f32.gmra.mrb[0].mxu0 %v1061
    %v1151 = vpop.f32.mrb[0].mxu0
    %v1152 = vadd.f32 0.0, %v1151
    %v1153 = vpop.f32.mrb[0].mxu0
    %1154 = vmatprep.mubr.f32.mxu0 0.0
    %1155 = vmatmul.mubr.f32.gmra.mrb[0].mxu0 %v1062
    %v1156 = vpop.f32.mrb[0].mxu0
    %v1157 = vadd.f32 0.0, %v1156
    %v1158 = vpop.f32.mrb[0].mxu0
    %1159 = vmatprep.mubr.f32.mxu0 0.0
    %1160 = vmatmul.mubr.f32.gmra.mrb[0].mxu0 %v1063
    %v1161 = vpop.f32.mrb[0].mxu0
    %v1162 = vadd.f32 0.0, %v1161
    %v1163 = vpop.f32.mrb[0].mxu0
    %1164 = vmatprep.mubr.f32.mxu0 0.0
    %1165 = vmatmul.mubr.f32.gmra.mrb[0].mxu0 %v1064
    %v1166 = vpop.f32.mrb[0].mxu0
    %v1167 = vadd.f32 0.0, %v1166
    %v1168 = vpop.f32.mrb[0].mxu0
    %1169 = vmatprep.mubr.f32.mxu0 0.0
    %1170 = vmatmul.mubr.f32.gmra.mrb[0].mxu0 %v1065
    %v1171 = vpop.f32.mrb[0].mxu0
    %v1172 = vadd.f32 0.0, %v1171
    %v1173 = vpop.f32.mrb[0].mxu0
    %1174 = vmatprep.mubr.f32.mxu0 0.0
    %1175 = vmatmul.mubr.f32.gmra.mrb[0].mxu0 %v1066
    %v1176 = vpop.f32.mrb[0].mxu0
    %v1177 = vadd.f32 0.0, %v1176
    %v1178 = vpop.f32.mrb[0].mxu0
    %1179 = vmatprep.mubr.f32.mxu0 0.0
    %1180 = vmatmul.mubr.f32.gmra.mrb[0].mxu0 %v1067
    %v1181 = vpop.f32.mrb[0].mxu0
    %v1182 = vadd.f32 0.0, %v1181
    %v1183 = vpop.f32.mrb[0].mxu0
    %1184 = vmatprep.mubr.f32.mxu0 0.0
    %1185 = vmatmul.mubr.f32.gmra.mrb[0].mxu0 %v1068
    %v1186 = vpop.f32.mrb[0].mxu0
    %v1187 = vadd.f32 0.0, %v1186
    %v1188 = vpop.f32.mrb[0].mxu0
    %1189 = vmatprep.mubr.f32.mxu0 0.0
    %1190 = vmatmul.mubr.f32.gmra.mrb[0].mxu0 %v1069
    %v1191 = vpop.f32.mrb[0].mxu0
    %v1192 = vadd.f32 0.0, %v1191
    %v1193 = vpop.f32.mrb[0].mxu0
    %1194 = vmatprep.mubr.f32.mxu0 0.0
    %1195 = vmatmul.mubr.f32.gmra.mrb[0].mxu0 %v1070
    %v1196 = vpop.f32.mrb[0].mxu0
    %v1197 = vadd.f32 0.0, %v1196
    %v1198 = vpop.f32.mrb[0].mxu0
    %1199 = vmatprep.mubr.f32.mxu0 0.0
    %1200 = vmatmul.mubr.f32.gmra.mrb[0].mxu0 %v1071
    %v1201 = vpop.f32.mrb[0].mxu0
    %v1202 = vadd.f32 0.0, %v1201
    %v1203 = vpop.f32.mrb[0].mxu0
    %1204 = vmatprep.mubr.f32.mxu0 0.0
    %1205 = vmatmul.mubr.f32.gmra.mrb[0].mxu0 %v1072
    %v1206 = vpop.f32.mrb[0].mxu0
    %v1207 = vadd.f32 0.0, %v1206
    %v1208 = vpop.f32.mrb[0].mxu0
    %1209 = vmatprep.mubr.f32.mxu0 0.0
    %1210 = vmatmul.mubr.f32.gmra.mrb[0].mxu0 %v1073
    %v1211 = vpop.f32.mrb[0].mxu0
    %v1212 = vadd.f32 0.0, %v1211
    %v1213 = vpop.f32.mrb[0].mxu0
    %1214 = vmatprep.mubr.f32.mxu0 0.0
    %1215 = vmatmul.mubr.f32.gmra.mrb[0].mxu0 %v1074
    %v1216 = vpop.f32.mrb[0].mxu0
    %v1217 = vadd.f32 0.0, %v1216
    %v1218 = vpop.f32.mrb[0].mxu0
    %1219 = vdwg.mxu0
    %1236 = vrot.lane.b32.xlu0 %v1142, 16
    %v1237 = vpop.permute.xlu0 %1236
    %1238 = vrot.lane.b32.xlu0 %v1147, 16
    %v1239 = vpop.permute.xlu0 %1238
    %1240 = vrot.lane.b32.xlu0 %v1152, 16
    %v1241 = vpop.permute.xlu0 %1240
    %1242 = vrot.lane.b32.xlu0 %v1157, 16
    %v1243 = vpop.permute.xlu0 %1242
    %1244 = vrot.lane.b32.xlu0 %v1162, 16
    %v1245 = vpop.permute.xlu0 %1244
    %1246 = vrot.lane.b32.xlu0 %v1167, 16
    %v1247 = vpop.permute.xlu0 %1246
    %1248 = vrot.lane.b32.xlu0 %v1172, 16
    %v1249 = vpop.permute.xlu0 %1248
    %1250 = vrot.lane.b32.xlu0 %v1177, 16
    %v1251 = vpop.permute.xlu0 %1250
    %1252 = vrot.lane.b32.xlu0 %v1182, 16
    %v1253 = vpop.permute.xlu0 %1252
    %1254 = vrot.lane.b32.xlu0 %v1187, 16
    %v1255 = vpop.permute.xlu0 %1254
    %1256 = vrot.lane.b32.xlu0 %v1192, 16
    %v1257 = vpop.permute.xlu0 %1256
    %1258 = vrot.lane.b32.xlu0 %v1197, 16
    %v1259 = vpop.permute.xlu0 %1258
    %1260 = vrot.lane.b32.xlu0 %v1202, 16
    %v1261 = vpop.permute.xlu0 %1260
    %1262 = vrot.lane.b32.xlu0 %v1207, 16
    %v1263 = vpop.permute.xlu0 %1262
    %1264 = vrot.lane.b32.xlu0 %v1212, 16
    %v1265 = vpop.permute.xlu0 %1264
    %1266 = vrot.lane.b32.xlu0 %v1217, 16
    %v1267 = vpop.permute.xlu0 %1266
    %vm1284 = vcmask 261248
    %1285 = vst.msk [vmem:[#allocation2] sm:$0xff] %vm1284, %v1237
    %1286 = vst.msk [vmem:[#allocation2 + $0x8] sm:$0xff] %vm1284, %v1239
    %1287 = vst.msk [vmem:[#allocation2 + $0x10] sm:$0xff] %vm1284, %v1241
    %1288 = vst.msk [vmem:[#allocation2 + $0x18] sm:$0xff] %vm1284, %v1243
    %1289 = vst.msk [vmem:[#allocation2 + $0x20] sm:$0xff] %vm1284, %v1245
    %1290 = vst.msk [vmem:[#allocation2 + $0x28] sm:$0xff] %vm1284, %v1247
    %1291 = vst.msk [vmem:[#allocation2 + $0x30] sm:$0xff] %vm1284, %v1249
    %1292 = vst.msk [vmem:[#allocation2 + $0x38] sm:$0xff] %vm1284, %v1251
    %1293 = vst.msk [vmem:[#allocation2 + $0x40] sm:$0xff] %vm1284, %v1253
    %1294 = vst.msk [vmem:[#allocation2 + $0x48] sm:$0xff] %vm1284, %v1255
    %1295 = vst.msk [vmem:[#allocation2 + $0x50] sm:$0xff] %vm1284, %v1257
    %1296 = vst.msk [vmem:[#allocation2 + $0x58] sm:$0xff] %vm1284, %v1259
    %1297 = vst.msk [vmem:[#allocation2 + $0x60] sm:$0xff] %vm1284, %v1261
    %1298 = vst.msk [vmem:[#allocation2 + $0x68] sm:$0xff] %vm1284, %v1263
    %1299 = vst.msk [vmem:[#allocation2 + $0x70] sm:$0xff] %vm1284, %v1265
    %1300 = vst.msk [vmem:[#allocation2 + $0x78] sm:$0xff] %vm1284, %v1267
    %s1301 = scalar_lea.vmem [#allocation3], 256
    %v1302 = vld [vmem:[%s1301] sm:$0xff]
    %v1303 = vld [vmem:[%s1301 + $0x8] sm:$0xff]
    %v1304 = vld [vmem:[%s1301 + $0x10] sm:$0xff]
    %v1305 = vld [vmem:[%s1301 + $0x18] sm:$0xff]
    %v1306 = vld [vmem:[%s1301 + $0x20] sm:$0xff]
    %v1307 = vld [vmem:[%s1301 + $0x28] sm:$0xff]
    %v1308 = vld [vmem:[%s1301 + $0x30] sm:$0xff]
    %v1309 = vld [vmem:[%s1301 + $0x38] sm:$0xff]
    %v1310 = vld [vmem:[%s1301 + $0x40] sm:$0xff]
    %v1311 = vld [vmem:[%s1301 + $0x48] sm:$0xff]
    %v1312 = vld [vmem:[%s1301 + $0x50] sm:$0xff]
    %v1313 = vld [vmem:[%s1301 + $0x58] sm:$0xff]
    %v1314 = vld [vmem:[%s1301 + $0x60] sm:$0xff]
    %v1315 = vld [vmem:[%s1301 + $0x68] sm:$0xff]
    %v1316 = vld [vmem:[%s1301 + $0x70] sm:$0xff]
    %v1317 = vld [vmem:[%s1301 + $0x78] sm:$0xff]
    %1318 = vmatprep.subr.mxu0 0.0
    %1319 = vmatpush1.msra.mxu0 %v848
    %1320 = vmatprep.subr.mxu0 0.0
    %1321 = vmatpush1.msra.mxu0 %v849
    %1322 = vmatprep.subr.mxu0 0.0
    %1323 = vmatpush1.msra.mxu0 %v850
    %1324 = vmatprep.subr.mxu0 0.0
    %1325 = vmatpush1.msra.mxu0 %v851
    %1326 = vmatprep.subr.mxu0 0.0
    %1327 = vmatpush1.msra.mxu0 %v852
    %1328 = vmatprep.subr.mxu0 0.0
    %1329 = vmatpush1.msra.mxu0 %v853
    %1330 = vmatprep.subr.mxu0 0.0
    %1331 = vmatpush1.msra.mxu0 %v854
    %1332 = vmatprep.subr.mxu0 0.0
    %1333 = vmatpush1.msra.mxu0 %v855
    %1334 = vmatprep.subr.mxu0 0.0
    %1335 = vmatpush1.msra.mxu0 %v856
    %1336 = vmatprep.subr.mxu0 0.0
    %1337 = vmatpush1.msra.mxu0 %v857
    %1338 = vmatprep.subr.mxu0 0.0
    %1339 = vmatpush1.msra.mxu0 %v858
    %1340 = vmatprep.subr.mxu0 0.0
    %1341 = vmatpush1.msra.mxu0 %v859
    %1342 = vmatprep.subr.mxu0 0.0
    %1343 = vmatpush1.msra.mxu0 %v860
    %1344 = vmatprep.subr.mxu0 0.0
    %1345 = vmatpush1.msra.mxu0 %v861
    %1346 = vmatprep.subr.mxu0 0.0
    %1347 = vmatpush1.msra.mxu0 %v862
    %1348 = vmatprep.subr.mxu0 0.0
    %1349 = vmatpush1.msra.mxu0 %v863
    %1350 = vmatprep.subr.mxu0 0.0
    %1351 = vmatpush1.msra.mxu0 0.0
    %1352 = vmatprep.subr.mxu0 0.0
    %1353 = vmatpush1.msra.mxu0 0.0
    %1354 = vmatprep.subr.mxu0 0.0
    %1355 = vmatpush1.msra.mxu0 0.0
    %1356 = vmatprep.subr.mxu0 0.0
    %1357 = vmatpush1.msra.mxu0 0.0
    %1358 = vmatprep.subr.mxu0 0.0
    %1359 = vmatpush1.msra.mxu0 0.0
    %1360 = vmatprep.subr.mxu0 0.0
    %1361 = vmatpush1.msra.mxu0 0.0
    %1362 = vmatprep.subr.mxu0 0.0
    %1363 = vmatpush1.msra.mxu0 0.0
    %1364 = vmatprep.subr.mxu0 0.0
    %1365 = vmatpush1.msra.mxu0 0.0
    %1366 = vmatprep.subr.mxu0 0.0
    %1367 = vmatpush1.msra.mxu0 0.0
    %1368 = vmatprep.subr.mxu0 0.0
    %1369 = vmatpush1.msra.mxu0 0.0
    %1370 = vmatprep.subr.mxu0 0.0
    %1371 = vmatpush1.msra.mxu0 0.0
    %1372 = vmatprep.subr.mxu0 0.0
    %1373 = vmatpush1.msra.mxu0 0.0
    %1374 = vmatprep.subr.mxu0 0.0
    %1375 = vmatpush1.msra.mxu0 0.0
    %1376 = vmatprep.subr.mxu0 0.0
    %1377 = vmatpush1.msra.mxu0 0.0
    %1378 = vmatprep.subr.mxu0 0.0
    %1379 = vmatpush1.msra.mxu0 0.0
    %1380 = vmatprep.subr.mxu0 0.0
    %1381 = vmatpush1.msra.mxu0 0.0
    %1382 = vmatprep.mubr.f32.mxu0 0.0
    %1383 = vmatmul.mubr.f32.gmra.mrb[0].mxu0 %v1302
    %v1384 = vpop.f32.mrb[0].mxu0
    %v1385 = vadd.f32 0.0, %v1384
    %v1386 = vpop.f32.mrb[0].mxu0
    %1387 = vmatprep.mubr.f32.mxu0 0.0
    %1388 = vmatmul.mubr.f32.gmra.mrb[0].mxu0 %v1303
    %v1389 = vpop.f32.mrb[0].mxu0
    %v1390 = vadd.f32 0.0, %v1389
    %v1391 = vpop.f32.mrb[0].mxu0
    %1392 = vmatprep.mubr.f32.mxu0 0.0
    %1393 = vmatmul.mubr.f32.gmra.mrb[0].mxu0 %v1304
    %v1394 = vpop.f32.mrb[0].mxu0
    %v1395 = vadd.f32 0.0, %v1394
    %v1396 = vpop.f32.mrb[0].mxu0
    %1397 = vmatprep.mubr.f32.mxu0 0.0
    %1398 = vmatmul.mubr.f32.gmra.mrb[0].mxu0 %v1305
    %v1399 = vpop.f32.mrb[0].mxu0
    %v1400 = vadd.f32 0.0, %v1399
    %v1401 = vpop.f32.mrb[0].mxu0
    %1402 = vmatprep.mubr.f32.mxu0 0.0
    %1403 = vmatmul.mubr.f32.gmra.mrb[0].mxu0 %v1306
    %v1404 = vpop.f32.mrb[0].mxu0
    %v1405 = vadd.f32 0.0, %v1404
    %v1406 = vpop.f32.mrb[0].mxu0
    %1407 = vmatprep.mubr.f32.mxu0 0.0
    %1408 = vmatmul.mubr.f32.gmra.mrb[0].mxu0 %v1307
    %v1409 = vpop.f32.mrb[0].mxu0
    %v1410 = vadd.f32 0.0, %v1409
    %v1411 = vpop.f32.mrb[0].mxu0
    %1412 = vmatprep.mubr.f32.mxu0 0.0
    %1413 = vmatmul.mubr.f32.gmra.mrb[0].mxu0 %v1308
    %v1414 = vpop.f32.mrb[0].mxu0
    %v1415 = vadd.f32 0.0, %v1414
    %v1416 = vpop.f32.mrb[0].mxu0
    %1417 = vmatprep.mubr.f32.mxu0 0.0
    %1418 = vmatmul.mubr.f32.gmra.mrb[0].mxu0 %v1309
    %v1419 = vpop.f32.mrb[0].mxu0
    %v1420 = vadd.f32 0.0, %v1419
    %v1421 = vpop.f32.mrb[0].mxu0
    %1422 = vmatprep.mubr.f32.mxu0 0.0
    %1423 = vmatmul.mubr.f32.gmra.mrb[0].mxu0 %v1310
    %v1424 = vpop.f32.mrb[0].mxu0
    %v1425 = vadd.f32 0.0, %v1424
    %v1426 = vpop.f32.mrb[0].mxu0
    %1427 = vmatprep.mubr.f32.mxu0 0.0
    %1428 = vmatmul.mubr.f32.gmra.mrb[0].mxu0 %v1311
    %v1429 = vpop.f32.mrb[0].mxu0
    %v1430 = vadd.f32 0.0, %v1429
    %v1431 = vpop.f32.mrb[0].mxu0
    %1432 = vmatprep.mubr.f32.mxu0 0.0
    %1433 = vmatmul.mubr.f32.gmra.mrb[0].mxu0 %v1312
    %v1434 = vpop.f32.mrb[0].mxu0
    %v1435 = vadd.f32 0.0, %v1434
    %v1436 = vpop.f32.mrb[0].mxu0
    %1437 = vmatprep.mubr.f32.mxu0 0.0
    %1438 = vmatmul.mubr.f32.gmra.mrb[0].mxu0 %v1313
    %v1439 = vpop.f32.mrb[0].mxu0
    %v1440 = vadd.f32 0.0, %v1439
    %v1441 = vpop.f32.mrb[0].mxu0
    %1442 = vmatprep.mubr.f32.mxu0 0.0
    %1443 = vmatmul.mubr.f32.gmra.mrb[0].mxu0 %v1314
    %v1444 = vpop.f32.mrb[0].mxu0
    %v1445 = vadd.f32 0.0, %v1444
    %v1446 = vpop.f32.mrb[0].mxu0
    %1447 = vmatprep.mubr.f32.mxu0 0.0
    %1448 = vmatmul.mubr.f32.gmra.mrb[0].mxu0 %v1315
    %v1449 = vpop.f32.mrb[0].mxu0
    %v1450 = vadd.f32 0.0, %v1449
    %v1451 = vpop.f32.mrb[0].mxu0
    %1452 = vmatprep.mubr.f32.mxu0 0.0
    %1453 = vmatmul.mubr.f32.gmra.mrb[0].mxu0 %v1316
    %v1454 = vpop.f32.mrb[0].mxu0
    %v1455 = vadd.f32 0.0, %v1454
    %v1456 = vpop.f32.mrb[0].mxu0
    %1457 = vmatprep.mubr.f32.mxu0 0.0
    %1458 = vmatmul.mubr.f32.gmra.mrb[0].mxu0 %v1317
    %v1459 = vpop.f32.mrb[0].mxu0
    %v1460 = vadd.f32 0.0, %v1459
    %v1461 = vpop.f32.mrb[0].mxu0
    %1462 = vdwg.mxu0
    %1479 = vrot.lane.b32.xlu0 %v1385, 32
    %v1480 = vpop.permute.xlu0 %1479
    %1481 = vrot.lane.b32.xlu0 %v1390, 32
    %v1482 = vpop.permute.xlu0 %1481
    %1483 = vrot.lane.b32.xlu0 %v1395, 32
    %v1484 = vpop.permute.xlu0 %1483
    %1485 = vrot.lane.b32.xlu0 %v1400, 32
    %v1486 = vpop.permute.xlu0 %1485
    %1487 = vrot.lane.b32.xlu0 %v1405, 32
    %v1488 = vpop.permute.xlu0 %1487
    %1489 = vrot.lane.b32.xlu0 %v1410, 32
    %v1490 = vpop.permute.xlu0 %1489
    %1491 = vrot.lane.b32.xlu0 %v1415, 32
    %v1492 = vpop.permute.xlu0 %1491
    %1493 = vrot.lane.b32.xlu0 %v1420, 32
    %v1494 = vpop.permute.xlu0 %1493
    %1495 = vrot.lane.b32.xlu0 %v1425, 32
    %v1496 = vpop.permute.xlu0 %1495
    %1497 = vrot.lane.b32.xlu0 %v1430, 32
    %v1498 = vpop.permute.xlu0 %1497
    %1499 = vrot.lane.b32.xlu0 %v1435, 32
    %v1500 = vpop.permute.xlu0 %1499
    %1501 = vrot.lane.b32.xlu0 %v1440, 32
    %v1502 = vpop.permute.xlu0 %1501
    %1503 = vrot.lane.b32.xlu0 %v1445, 32
    %v1504 = vpop.permute.xlu0 %1503
    %1505 = vrot.lane.b32.xlu0 %v1450, 32
    %v1506 = vpop.permute.xlu0 %1505
    %1507 = vrot.lane.b32.xlu0 %v1455, 32
    %v1508 = vpop.permute.xlu0 %1507
    %1509 = vrot.lane.b32.xlu0 %v1460, 32
    %v1510 = vpop.permute.xlu0 %1509
    %vm1527 = vcmask 392448
    %1528 = vst.msk [vmem:[#allocation2] sm:$0xff] %vm1527, %v1480
    %1529 = vst.msk [vmem:[#allocation2 + $0x8] sm:$0xff] %vm1527, %v1482
    %1530 = vst.msk [vmem:[#allocation2 + $0x10] sm:$0xff] %vm1527, %v1484
    %1531 = vst.msk [vmem:[#allocation2 + $0x18] sm:$0xff] %vm1527, %v1486
    %1532 = vst.msk [vmem:[#allocation2 + $0x20] sm:$0xff] %vm1527, %v1488
    %1533 = vst.msk [vmem:[#allocation2 + $0x28] sm:$0xff] %vm1527, %v1490
    %1534 = vst.msk [vmem:[#allocation2 + $0x30] sm:$0xff] %vm1527, %v1492
    %1535 = vst.msk [vmem:[#allocation2 + $0x38] sm:$0xff] %vm1527, %v1494
    %1536 = vst.msk [vmem:[#allocation2 + $0x40] sm:$0xff] %vm1527, %v1496
    %1537 = vst.msk [vmem:[#allocation2 + $0x48] sm:$0xff] %vm1527, %v1498
    %1538 = vst.msk [vmem:[#allocation2 + $0x50] sm:$0xff] %vm1527, %v1500
    %1539 = vst.msk [vmem:[#allocation2 + $0x58] sm:$0xff] %vm1527, %v1502
    %1540 = vst.msk [vmem:[#allocation2 + $0x60] sm:$0xff] %vm1527, %v1504
    %1541 = vst.msk [vmem:[#allocation2 + $0x68] sm:$0xff] %vm1527, %v1506
    %1542 = vst.msk [vmem:[#allocation2 + $0x70] sm:$0xff] %vm1527, %v1508
    %1543 = vst.msk [vmem:[#allocation2 + $0x78] sm:$0xff] %vm1527, %v1510
    %s1544 = scalar_lea.vmem [#allocation3], 384
    %v1545 = vld [vmem:[%s1544] sm:$0xff]
    %v1546 = vld [vmem:[%s1544 + $0x8] sm:$0xff]
    %v1547 = vld [vmem:[%s1544 + $0x10] sm:$0xff]
    %v1548 = vld [vmem:[%s1544 + $0x18] sm:$0xff]
    %v1549 = vld [vmem:[%s1544 + $0x20] sm:$0xff]
    %v1550 = vld [vmem:[%s1544 + $0x28] sm:$0xff]
    %v1551 = vld [vmem:[%s1544 + $0x30] sm:$0xff]
    %v1552 = vld [vmem:[%s1544 + $0x38] sm:$0xff]
    %v1553 = vld [vmem:[%s1544 + $0x40] sm:$0xff]
    %v1554 = vld [vmem:[%s1544 + $0x48] sm:$0xff]
    %v1555 = vld [vmem:[%s1544 + $0x50] sm:$0xff]
    %v1556 = vld [vmem:[%s1544 + $0x58] sm:$0xff]
    %v1557 = vld [vmem:[%s1544 + $0x60] sm:$0xff]
    %v1558 = vld [vmem:[%s1544 + $0x68] sm:$0xff]
    %v1559 = vld [vmem:[%s1544 + $0x70] sm:$0xff]
    %v1560 = vld [vmem:[%s1544 + $0x78] sm:$0xff]
    %1561 = vmatprep.subr.mxu0 0.0
    %1562 = vmatpush1.msra.mxu0 %v848
    %1563 = vmatprep.subr.mxu0 0.0
    %1564 = vmatpush1.msra.mxu0 %v849
    %1565 = vmatprep.subr.mxu0 0.0
    %1566 = vmatpush1.msra.mxu0 %v850
    %1567 = vmatprep.subr.mxu0 0.0
    %1568 = vmatpush1.msra.mxu0 %v851
    %1569 = vmatprep.subr.mxu0 0.0
    %1570 = vmatpush1.msra.mxu0 %v852
    %1571 = vmatprep.subr.mxu0 0.0
    %1572 = vmatpush1.msra.mxu0 %v853
    %1573 = vmatprep.subr.mxu0 0.0
    %1574 = vmatpush1.msra.mxu0 %v854
    %1575 = vmatprep.subr.mxu0 0.0
    %1576 = vmatpush1.msra.mxu0 %v855
    %1577 = vmatprep.subr.mxu0 0.0
    %1578 = vmatpush1.msra.mxu0 %v856
    %1579 = vmatprep.subr.mxu0 0.0
    %1580 = vmatpush1.msra.mxu0 %v857
    %1581 = vmatprep.subr.mxu0 0.0
    %1582 = vmatpush1.msra.mxu0 %v858
    %1583 = vmatprep.subr.mxu0 0.0
    %1584 = vmatpush1.msra.mxu0 %v859
    %1585 = vmatprep.subr.mxu0 0.0
    %1586 = vmatpush1.msra.mxu0 %v860
    %1587 = vmatprep.subr.mxu0 0.0
    %1588 = vmatpush1.msra.mxu0 %v861
    %1589 = vmatprep.subr.mxu0 0.0
    %1590 = vmatpush1.msra.mxu0 %v862
    %1591 = vmatprep.subr.mxu0 0.0
    %1592 = vmatpush1.msra.mxu0 %v863
    %1593 = vmatprep.subr.mxu0 0.0
    %1594 = vmatpush1.msra.mxu0 0.0
    %1595 = vmatprep.subr.mxu0 0.0
    %1596 = vmatpush1.msra.mxu0 0.0
    %1597 = vmatprep.subr.mxu0 0.0
    %1598 = vmatpush1.msra.mxu0 0.0
    %1599 = vmatprep.subr.mxu0 0.0
    %1600 = vmatpush1.msra.mxu0 0.0
    %1601 = vmatprep.subr.mxu0 0.0
    %1602 = vmatpush1.msra.mxu0 0.0
    %1603 = vmatprep.subr.mxu0 0.0
    %1604 = vmatpush1.msra.mxu0 0.0
    %1605 = vmatprep.subr.mxu0 0.0
    %1606 = vmatpush1.msra.mxu0 0.0
    %1607 = vmatprep.subr.mxu0 0.0
    %1608 = vmatpush1.msra.mxu0 0.0
    %1609 = vmatprep.subr.mxu0 0.0
    %1610 = vmatpush1.msra.mxu0 0.0
    %1611 = vmatprep.subr.mxu0 0.0
    %1612 = vmatpush1.msra.mxu0 0.0
    %1613 = vmatprep.subr.mxu0 0.0
    %1614 = vmatpush1.msra.mxu0 0.0
    %1615 = vmatprep.subr.mxu0 0.0
    %1616 = vmatpush1.msra.mxu0 0.0
    %1617 = vmatprep.subr.mxu0 0.0
    %1618 = vmatpush1.msra.mxu0 0.0
    %1619 = vmatprep.subr.mxu0 0.0
    %1620 = vmatpush1.msra.mxu0 0.0
    %1621 = vmatprep.subr.mxu0 0.0
    %1622 = vmatpush1.msra.mxu0 0.0
    %1623 = vmatprep.subr.mxu0 0.0
    %1624 = vmatpush1.msra.mxu0 0.0
    %1625 = vmatprep.mubr.f32.mxu0 0.0
    %1626 = vmatmul.mubr.f32.gmra.mrb[0].mxu0 %v1545
    %v1627 = vpop.f32.mrb[0].mxu0
    %v1628 = vadd.f32 0.0, %v1627
    %v1629 = vpop.f32.mrb[0].mxu0
    %1630 = vmatprep.mubr.f32.mxu0 0.0
    %1631 = vmatmul.mubr.f32.gmra.mrb[0].mxu0 %v1546
    %v1632 = vpop.f32.mrb[0].mxu0
    %v1633 = vadd.f32 0.0, %v1632
    %v1634 = vpop.f32.mrb[0].mxu0
    %1635 = vmatprep.mubr.f32.mxu0 0.0
    %1636 = vmatmul.mubr.f32.gmra.mrb[0].mxu0 %v1547
    %v1637 = vpop.f32.mrb[0].mxu0
    %v1638 = vadd.f32 0.0, %v1637
    %v1639 = vpop.f32.mrb[0].mxu0
    %1640 = vmatprep.mubr.f32.mxu0 0.0
    %1641 = vmatmul.mubr.f32.gmra.mrb[0].mxu0 %v1548
    %v1642 = vpop.f32.mrb[0].mxu0
    %v1643 = vadd.f32 0.0, %v1642
    %v1644 = vpop.f32.mrb[0].mxu0
    %1645 = vmatprep.mubr.f32.mxu0 0.0
    %1646 = vmatmul.mubr.f32.gmra.mrb[0].mxu0 %v1549
    %v1647 = vpop.f32.mrb[0].mxu0
    %v1648 = vadd.f32 0.0, %v1647
    %v1649 = vpop.f32.mrb[0].mxu0
    %1650 = vmatprep.mubr.f32.mxu0 0.0
    %1651 = vmatmul.mubr.f32.gmra.mrb[0].mxu0 %v1550
    %v1652 = vpop.f32.mrb[0].mxu0
    %v1653 = vadd.f32 0.0, %v1652
    %v1654 = vpop.f32.mrb[0].mxu0
    %1655 = vmatprep.mubr.f32.mxu0 0.0
    %1656 = vmatmul.mubr.f32.gmra.mrb[0].mxu0 %v1551
    %v1657 = vpop.f32.mrb[0].mxu0
    %v1658 = vadd.f32 0.0, %v1657
    %v1659 = vpop.f32.mrb[0].mxu0
    %1660 = vmatprep.mubr.f32.mxu0 0.0
    %1661 = vmatmul.mubr.f32.gmra.mrb[0].mxu0 %v1552
    %v1662 = vpop.f32.mrb[0].mxu0
    %v1663 = vadd.f32 0.0, %v1662
    %v1664 = vpop.f32.mrb[0].mxu0
    %1665 = vmatprep.mubr.f32.mxu0 0.0
    %1666 = vmatmul.mubr.f32.gmra.mrb[0].mxu0 %v1553
    %v1667 = vpop.f32.mrb[0].mxu0
    %v1668 = vadd.f32 0.0, %v1667
    %v1669 = vpop.f32.mrb[0].mxu0
    %1670 = vmatprep.mubr.f32.mxu0 0.0
    %1671 = vmatmul.mubr.f32.gmra.mrb[0].mxu0 %v1554
    %v1672 = vpop.f32.mrb[0].mxu0
    %v1673 = vadd.f32 0.0, %v1672
    %v1674 = vpop.f32.mrb[0].mxu0
    %1675 = vmatprep.mubr.f32.mxu0 0.0
    %1676 = vmatmul.mubr.f32.gmra.mrb[0].mxu0 %v1555
    %v1677 = vpop.f32.mrb[0].mxu0
    %v1678 = vadd.f32 0.0, %v1677
    %v1679 = vpop.f32.mrb[0].mxu0
    %1680 = vmatprep.mubr.f32.mxu0 0.0
    %1681 = vmatmul.mubr.f32.gmra.mrb[0].mxu0 %v1556
    %v1682 = vpop.f32.mrb[0].mxu0
    %v1683 = vadd.f32 0.0, %v1682
    %v1684 = vpop.f32.mrb[0].mxu0
    %1685 = vmatprep.mubr.f32.mxu0 0.0
    %1686 = vmatmul.mubr.f32.gmra.mrb[0].mxu0 %v1557
    %v1687 = vpop.f32.mrb[0].mxu0
    %v1688 = vadd.f32 0.0, %v1687
    %v1689 = vpop.f32.mrb[0].mxu0
    %1690 = vmatprep.mubr.f32.mxu0 0.0
    %1691 = vmatmul.mubr.f32.gmra.mrb[0].mxu0 %v1558
    %v1692 = vpop.f32.mrb[0].mxu0
    %v1693 = vadd.f32 0.0, %v1692
    %v1694 = vpop.f32.mrb[0].mxu0
    %1695 = vmatprep.mubr.f32.mxu0 0.0
    %1696 = vmatmul.mubr.f32.gmra.mrb[0].mxu0 %v1559
    %v1697 = vpop.f32.mrb[0].mxu0
    %v1698 = vadd.f32 0.0, %v1697
    %v1699 = vpop.f32.mrb[0].mxu0
    %1700 = vmatprep.mubr.f32.mxu0 0.0
    %1701 = vmatmul.mubr.f32.gmra.mrb[0].mxu0 %v1560
    %v1702 = vpop.f32.mrb[0].mxu0
    %v1703 = vadd.f32 0.0, %v1702
    %v1704 = vpop.f32.mrb[0].mxu0
    %1705 = vdwg.mxu0
    %1722 = vrot.lane.b32.xlu0 %v1628, 48
    %v1723 = vpop.permute.xlu0 %1722
    %1724 = vrot.lane.b32.xlu0 %v1633, 48
    %v1725 = vpop.permute.xlu0 %1724
    %1726 = vrot.lane.b32.xlu0 %v1638, 48
    %v1727 = vpop.permute.xlu0 %1726
    %1728 = vrot.lane.b32.xlu0 %v1643, 48
    %v1729 = vpop.permute.xlu0 %1728
    %1730 = vrot.lane.b32.xlu0 %v1648, 48
    %v1731 = vpop.permute.xlu0 %1730
    %1732 = vrot.lane.b32.xlu0 %v1653, 48
    %v1733 = vpop.permute.xlu0 %1732
    %1734 = vrot.lane.b32.xlu0 %v1658, 48
    %v1735 = vpop.permute.xlu0 %1734
    %1736 = vrot.lane.b32.xlu0 %v1663, 48
    %v1737 = vpop.permute.xlu0 %1736
    %1738 = vrot.lane.b32.xlu0 %v1668, 48
    %v1739 = vpop.permute.xlu0 %1738
    %1740 = vrot.lane.b32.xlu0 %v1673, 48
    %v1741 = vpop.permute.xlu0 %1740
    %1742 = vrot.lane.b32.xlu0 %v1678, 48
    %v1743 = vpop.permute.xlu0 %1742
    %1744 = vrot.lane.b32.xlu0 %v1683, 48
    %v1745 = vpop.permute.xlu0 %1744
    %1746 = vrot.lane.b32.xlu0 %v1688, 48
    %v1747 = vpop.permute.xlu0 %1746
    %1748 = vrot.lane.b32.xlu0 %v1693, 48
    %v1749 = vpop.permute.xlu0 %1748
    %1750 = vrot.lane.b32.xlu0 %v1698, 48
    %v1751 = vpop.permute.xlu0 %1750
    %1752 = vrot.lane.b32.xlu0 %v1703, 48
    %v1753 = vpop.permute.xlu0 %1752
    %vm1770 = vcmask 523648
    %1771 = vst.msk [vmem:[#allocation2] sm:$0xff] %vm1770, %v1723
    %1772 = vst.msk [vmem:[#allocation2 + $0x8] sm:$0xff] %vm1770, %v1725
    %1773 = vst.msk [vmem:[#allocation2 + $0x10] sm:$0xff] %vm1770, %v1727
    %1774 = vst.msk [vmem:[#allocation2 + $0x18] sm:$0xff] %vm1770, %v1729
    %1775 = vst.msk [vmem:[#allocation2 + $0x20] sm:$0xff] %vm1770, %v1731
    %1776 = vst.msk [vmem:[#allocation2 + $0x28] sm:$0xff] %vm1770, %v1733
    %1777 = vst.msk [vmem:[#allocation2 + $0x30] sm:$0xff] %vm1770, %v1735
    %1778 = vst.msk [vmem:[#allocation2 + $0x38] sm:$0xff] %vm1770, %v1737
    %1779 = vst.msk [vmem:[#allocation2 + $0x40] sm:$0xff] %vm1770, %v1739
    %1780 = vst.msk [vmem:[#allocation2 + $0x48] sm:$0xff] %vm1770, %v1741
    %1781 = vst.msk [vmem:[#allocation2 + $0x50] sm:$0xff] %vm1770, %v1743
    %1782 = vst.msk [vmem:[#allocation2 + $0x58] sm:$0xff] %vm1770, %v1745
    %1783 = vst.msk [vmem:[#allocation2 + $0x60] sm:$0xff] %vm1770, %v1747
    %1784 = vst.msk [vmem:[#allocation2 + $0x68] sm:$0xff] %vm1770, %v1749
    %1785 = vst.msk [vmem:[#allocation2 + $0x70] sm:$0xff] %vm1770, %v1751
    %1786 = vst.msk [vmem:[#allocation2 + $0x78] sm:$0xff] %vm1770, %v1753
    %s1787 = scalar_lea.vmem [#allocation3], 512
    %v1788 = vld [vmem:[%s1787] sm:$0xff]
    %v1789 = vld [vmem:[%s1787 + $0x8] sm:$0xff]
    %v1790 = vld [vmem:[%s1787 + $0x10] sm:$0xff]
    %v1791 = vld [vmem:[%s1787 + $0x18] sm:$0xff]
    %v1792 = vld [vmem:[%s1787 + $0x20] sm:$0xff]
    %v1793 = vld [vmem:[%s1787 + $0x28] sm:$0xff]
    %v1794 = vld [vmem:[%s1787 + $0x30] sm:$0xff]
    %v1795 = vld [vmem:[%s1787 + $0x38] sm:$0xff]
    %v1796 = vld [vmem:[%s1787 + $0x40] sm:$0xff]
    %v1797 = vld [vmem:[%s1787 + $0x48] sm:$0xff]
    %v1798 = vld [vmem:[%s1787 + $0x50] sm:$0xff]
    %v1799 = vld [vmem:[%s1787 + $0x58] sm:$0xff]
    %v1800 = vld [vmem:[%s1787 + $0x60] sm:$0xff]
    %v1801 = vld [vmem:[%s1787 + $0x68] sm:$0xff]
    %v1802 = vld [vmem:[%s1787 + $0x70] sm:$0xff]
    %v1803 = vld [vmem:[%s1787 + $0x78] sm:$0xff]
    %1804 = vmatprep.subr.mxu0 0.0
    %1805 = vmatpush1.msra.mxu0 %v848
    %1806 = vmatprep.subr.mxu0 0.0
    %1807 = vmatpush1.msra.mxu0 %v849
    %1808 = vmatprep.subr.mxu0 0.0
    %1809 = vmatpush1.msra.mxu0 %v850
    %1810 = vmatprep.subr.mxu0 0.0
    %1811 = vmatpush1.msra.mxu0 %v851
    %1812 = vmatprep.subr.mxu0 0.0
    %1813 = vmatpush1.msra.mxu0 %v852
    %1814 = vmatprep.subr.mxu0 0.0
    %1815 = vmatpush1.msra.mxu0 %v853
    %1816 = vmatprep.subr.mxu0 0.0
    %1817 = vmatpush1.msra.mxu0 %v854
    %1818 = vmatprep.subr.mxu0 0.0
    %1819 = vmatpush1.msra.mxu0 %v855
    %1820 = vmatprep.subr.mxu0 0.0
    %1821 = vmatpush1.msra.mxu0 %v856
    %1822 = vmatprep.subr.mxu0 0.0
    %1823 = vmatpush1.msra.mxu0 %v857
    %1824 = vmatprep.subr.mxu0 0.0
    %1825 = vmatpush1.msra.mxu0 %v858
    %1826 = vmatprep.subr.mxu0 0.0
    %1827 = vmatpush1.msra.mxu0 %v859
    %1828 = vmatprep.subr.mxu0 0.0
    %1829 = vmatpush1.msra.mxu0 %v860
    %1830 = vmatprep.subr.mxu0 0.0
    %1831 = vmatpush1.msra.mxu0 %v861
    %1832 = vmatprep.subr.mxu0 0.0
    %1833 = vmatpush1.msra.mxu0 %v862
    %1834 = vmatprep.subr.mxu0 0.0
    %1835 = vmatpush1.msra.mxu0 %v863
    %1836 = vmatprep.subr.mxu0 0.0
    %1837 = vmatpush1.msra.mxu0 0.0
    %1838 = vmatprep.subr.mxu0 0.0
    %1839 = vmatpush1.msra.mxu0 0.0
    %1840 = vmatprep.subr.mxu0 0.0
    %1841 = vmatpush1.msra.mxu0 0.0
    %1842 = vmatprep.subr.mxu0 0.0
    %1843 = vmatpush1.msra.mxu0 0.0
    %1844 = vmatprep.subr.mxu0 0.0
    %1845 = vmatpush1.msra.mxu0 0.0
    %1846 = vmatprep.subr.mxu0 0.0
    %1847 = vmatpush1.msra.mxu0 0.0
    %1848 = vmatprep.subr.mxu0 0.0
    %1849 = vmatpush1.msra.mxu0 0.0
    %1850 = vmatprep.subr.mxu0 0.0
    %1851 = vmatpush1.msra.mxu0 0.0
    %1852 = vmatprep.subr.mxu0 0.0
    %1853 = vmatpush1.msra.mxu0 0.0
    %1854 = vmatprep.subr.mxu0 0.0
    %1855 = vmatpush1.msra.mxu0 0.0
    %1856 = vmatprep.subr.mxu0 0.0
    %1857 = vmatpush1.msra.mxu0 0.0
    %1858 = vmatprep.subr.mxu0 0.0
    %1859 = vmatpush1.msra.mxu0 0.0
    %1860 = vmatprep.subr.mxu0 0.0
    %1861 = vmatpush1.msra.mxu0 0.0
    %1862 = vmatprep.subr.mxu0 0.0
    %1863 = vmatpush1.msra.mxu0 0.0
    %1864 = vmatprep.subr.mxu0 0.0
    %1865 = vmatpush1.msra.mxu0 0.0
    %1866 = vmatprep.subr.mxu0 0.0
    %1867 = vmatpush1.msra.mxu0 0.0
    %1868 = vmatprep.mubr.f32.mxu0 0.0
    %1869 = vmatmul.mubr.f32.gmra.mrb[0].mxu0 %v1788
    %v1870 = vpop.f32.mrb[0].mxu0
    %v1871 = vadd.f32 0.0, %v1870
    %v1872 = vpop.f32.mrb[0].mxu0
    %1873 = vmatprep.mubr.f32.mxu0 0.0
    %1874 = vmatmul.mubr.f32.gmra.mrb[0].mxu0 %v1789
    %v1875 = vpop.f32.mrb[0].mxu0
    %v1876 = vadd.f32 0.0, %v1875
    %v1877 = vpop.f32.mrb[0].mxu0
    %1878 = vmatprep.mubr.f32.mxu0 0.0
    %1879 = vmatmul.mubr.f32.gmra.mrb[0].mxu0 %v1790
    %v1880 = vpop.f32.mrb[0].mxu0
    %v1881 = vadd.f32 0.0, %v1880
    %v1882 = vpop.f32.mrb[0].mxu0
    %1883 = vmatprep.mubr.f32.mxu0 0.0
    %1884 = vmatmul.mubr.f32.gmra.mrb[0].mxu0 %v1791
    %v1885 = vpop.f32.mrb[0].mxu0
    %v1886 = vadd.f32 0.0, %v1885
    %v1887 = vpop.f32.mrb[0].mxu0
    %1888 = vmatprep.mubr.f32.mxu0 0.0
    %1889 = vmatmul.mubr.f32.gmra.mrb[0].mxu0 %v1792
    %v1890 = vpop.f32.mrb[0].mxu0
    %v1891 = vadd.f32 0.0, %v1890
    %v1892 = vpop.f32.mrb[0].mxu0
    %1893 = vmatprep.mubr.f32.mxu0 0.0
    %1894 = vmatmul.mubr.f32.gmra.mrb[0].mxu0 %v1793
    %v1895 = vpop.f32.mrb[0].mxu0
    %v1896 = vadd.f32 0.0, %v1895
    %v1897 = vpop.f32.mrb[0].mxu0
    %1898 = vmatprep.mubr.f32.mxu0 0.0
    %1899 = vmatmul.mubr.f32.gmra.mrb[0].mxu0 %v1794
    %v1900 = vpop.f32.mrb[0].mxu0
    %v1901 = vadd.f32 0.0, %v1900
    %v1902 = vpop.f32.mrb[0].mxu0
    %1903 = vmatprep.mubr.f32.mxu0 0.0
    %1904 = vmatmul.mubr.f32.gmra.mrb[0].mxu0 %v1795
    %v1905 = vpop.f32.mrb[0].mxu0
    %v1906 = vadd.f32 0.0, %v1905
    %v1907 = vpop.f32.mrb[0].mxu0
    %1908 = vmatprep.mubr.f32.mxu0 0.0
    %1909 = vmatmul.mubr.f32.gmra.mrb[0].mxu0 %v1796
    %v1910 = vpop.f32.mrb[0].mxu0
    %v1911 = vadd.f32 0.0, %v1910
    %v1912 = vpop.f32.mrb[0].mxu0
    %1913 = vmatprep.mubr.f32.mxu0 0.0
    %1914 = vmatmul.mubr.f32.gmra.mrb[0].mxu0 %v1797
    %v1915 = vpop.f32.mrb[0].mxu0
    %v1916 = vadd.f32 0.0, %v1915
    %v1917 = vpop.f32.mrb[0].mxu0
    %1918 = vmatprep.mubr.f32.mxu0 0.0
    %1919 = vmatmul.mubr.f32.gmra.mrb[0].mxu0 %v1798
    %v1920 = vpop.f32.mrb[0].mxu0
    %v1921 = vadd.f32 0.0, %v1920
    %v1922 = vpop.f32.mrb[0].mxu0
    %1923 = vmatprep.mubr.f32.mxu0 0.0
    %1924 = vmatmul.mubr.f32.gmra.mrb[0].mxu0 %v1799
    %v1925 = vpop.f32.mrb[0].mxu0
    %v1926 = vadd.f32 0.0, %v1925
    %v1927 = vpop.f32.mrb[0].mxu0
    %1928 = vmatprep.mubr.f32.mxu0 0.0
    %1929 = vmatmul.mubr.f32.gmra.mrb[0].mxu0 %v1800
    %v1930 = vpop.f32.mrb[0].mxu0
    %v1931 = vadd.f32 0.0, %v1930
    %v1932 = vpop.f32.mrb[0].mxu0
    %1933 = vmatprep.mubr.f32.mxu0 0.0
    %1934 = vmatmul.mubr.f32.gmra.mrb[0].mxu0 %v1801
    %v1935 = vpop.f32.mrb[0].mxu0
    %v1936 = vadd.f32 0.0, %v1935
    %v1937 = vpop.f32.mrb[0].mxu0
    %1938 = vmatprep.mubr.f32.mxu0 0.0
    %1939 = vmatmul.mubr.f32.gmra.mrb[0].mxu0 %v1802
    %v1940 = vpop.f32.mrb[0].mxu0
    %v1941 = vadd.f32 0.0, %v1940
    %v1942 = vpop.f32.mrb[0].mxu0
    %1943 = vmatprep.mubr.f32.mxu0 0.0
    %1944 = vmatmul.mubr.f32.gmra.mrb[0].mxu0 %v1803
    %v1945 = vpop.f32.mrb[0].mxu0
    %v1946 = vadd.f32 0.0, %v1945
    %v1947 = vpop.f32.mrb[0].mxu0
    %1948 = vdwg.mxu0
    %1965 = vrot.lane.b32.xlu0 %v1871, 64
    %v1966 = vpop.permute.xlu0 %1965
    %1967 = vrot.lane.b32.xlu0 %v1876, 64
    %v1968 = vpop.permute.xlu0 %1967
    %1969 = vrot.lane.b32.xlu0 %v1881, 64
    %v1970 = vpop.permute.xlu0 %1969
    %1971 = vrot.lane.b32.xlu0 %v1886, 64
    %v1972 = vpop.permute.xlu0 %1971
    %1973 = vrot.lane.b32.xlu0 %v1891, 64
    %v1974 = vpop.permute.xlu0 %1973
    %1975 = vrot.lane.b32.xlu0 %v1896, 64
    %v1976 = vpop.permute.xlu0 %1975
    %1977 = vrot.lane.b32.xlu0 %v1901, 64
    %v1978 = vpop.permute.xlu0 %1977
    %1979 = vrot.lane.b32.xlu0 %v1906, 64
    %v1980 = vpop.permute.xlu0 %1979
    %1981 = vrot.lane.b32.xlu0 %v1911, 64
    %v1982 = vpop.permute.xlu0 %1981
    %1983 = vrot.lane.b32.xlu0 %v1916, 64
    %v1984 = vpop.permute.xlu0 %1983
    %1985 = vrot.lane.b32.xlu0 %v1921, 64
    %v1986 = vpop.permute.xlu0 %1985
    %1987 = vrot.lane.b32.xlu0 %v1926, 64
    %v1988 = vpop.permute.xlu0 %1987
    %1989 = vrot.lane.b32.xlu0 %v1931, 64
    %v1990 = vpop.permute.xlu0 %1989
    %1991 = vrot.lane.b32.xlu0 %v1936, 64
    %v1992 = vpop.permute.xlu0 %1991
    %1993 = vrot.lane.b32.xlu0 %v1941, 64
    %v1994 = vpop.permute.xlu0 %1993
    %1995 = vrot.lane.b32.xlu0 %v1946, 64
    %v1996 = vpop.permute.xlu0 %1995
    %vm2013 = vcmask 654848
    %2014 = vst.msk [vmem:[#allocation2] sm:$0xff] %vm2013, %v1966
    %2015 = vst.msk [vmem:[#allocation2 + $0x8] sm:$0xff] %vm2013, %v1968
    %2016 = vst.msk [vmem:[#allocation2 + $0x10] sm:$0xff] %vm2013, %v1970
    %2017 = vst.msk [vmem:[#allocation2 + $0x18] sm:$0xff] %vm2013, %v1972
    %2018 = vst.msk [vmem:[#allocation2 + $0x20] sm:$0xff] %vm2013, %v1974
    %2019 = vst.msk [vmem:[#allocation2 + $0x28] sm:$0xff] %vm2013, %v1976
    %2020 = vst.msk [vmem:[#allocation2 + $0x30] sm:$0xff] %vm2013, %v1978
    %2021 = vst.msk [vmem:[#allocation2 + $0x38] sm:$0xff] %vm2013, %v1980
    %2022 = vst.msk [vmem:[#allocation2 + $0x40] sm:$0xff] %vm2013, %v1982
    %2023 = vst.msk [vmem:[#allocation2 + $0x48] sm:$0xff] %vm2013, %v1984
    %2024 = vst.msk [vmem:[#allocation2 + $0x50] sm:$0xff] %vm2013, %v1986
    %2025 = vst.msk [vmem:[#allocation2 + $0x58] sm:$0xff] %vm2013, %v1988
    %2026 = vst.msk [vmem:[#allocation2 + $0x60] sm:$0xff] %vm2013, %v1990
    %2027 = vst.msk [vmem:[#allocation2 + $0x68] sm:$0xff] %vm2013, %v1992
    %2028 = vst.msk [vmem:[#allocation2 + $0x70] sm:$0xff] %vm2013, %v1994
    %2029 = vst.msk [vmem:[#allocation2 + $0x78] sm:$0xff] %vm2013, %v1996
    %s2030 = scalar_lea.vmem [#allocation3], 640
    %v2031 = vld [vmem:[%s2030] sm:$0xff]
    %v2032 = vld [vmem:[%s2030 + $0x8] sm:$0xff]
    %v2033 = vld [vmem:[%s2030 + $0x10] sm:$0xff]
    %v2034 = vld [vmem:[%s2030 + $0x18] sm:$0xff]
    %v2035 = vld [vmem:[%s2030 + $0x20] sm:$0xff]
    %v2036 = vld [vmem:[%s2030 + $0x28] sm:$0xff]
    %v2037 = vld [vmem:[%s2030 + $0x30] sm:$0xff]
    %v2038 = vld [vmem:[%s2030 + $0x38] sm:$0xff]
    %v2039 = vld [vmem:[%s2030 + $0x40] sm:$0xff]
    %v2040 = vld [vmem:[%s2030 + $0x48] sm:$0xff]
    %v2041 = vld [vmem:[%s2030 + $0x50] sm:$0xff]
    %v2042 = vld [vmem:[%s2030 + $0x58] sm:$0xff]
    %v2043 = vld [vmem:[%s2030 + $0x60] sm:$0xff]
    %v2044 = vld [vmem:[%s2030 + $0x68] sm:$0xff]
    %v2045 = vld [vmem:[%s2030 + $0x70] sm:$0xff]
    %v2046 = vld [vmem:[%s2030 + $0x78] sm:$0xff]
    %2047 = vmatprep.subr.mxu0 0.0
    %2048 = vmatpush1.msra.mxu0 %v848
    %2049 = vmatprep.subr.mxu0 0.0
    %2050 = vmatpush1.msra.mxu0 %v849
    %2051 = vmatprep.subr.mxu0 0.0
    %2052 = vmatpush1.msra.mxu0 %v850
    %2053 = vmatprep.subr.mxu0 0.0
    %2054 = vmatpush1.msra.mxu0 %v851
    %2055 = vmatprep.subr.mxu0 0.0
    %2056 = vmatpush1.msra.mxu0 %v852
    %2057 = vmatprep.subr.mxu0 0.0
    %2058 = vmatpush1.msra.mxu0 %v853
    %2059 = vmatprep.subr.mxu0 0.0
    %2060 = vmatpush1.msra.mxu0 %v854
    %2061 = vmatprep.subr.mxu0 0.0
    %2062 = vmatpush1.msra.mxu0 %v855
    %2063 = vmatprep.subr.mxu0 0.0
    %2064 = vmatpush1.msra.mxu0 %v856
    %2065 = vmatprep.subr.mxu0 0.0
    %2066 = vmatpush1.msra.mxu0 %v857
    %2067 = vmatprep.subr.mxu0 0.0
    %2068 = vmatpush1.msra.mxu0 %v858
    %2069 = vmatprep.subr.mxu0 0.0
    %2070 = vmatpush1.msra.mxu0 %v859
    %2071 = vmatprep.subr.mxu0 0.0
    %2072 = vmatpush1.msra.mxu0 %v860
    %2073 = vmatprep.subr.mxu0 0.0
    %2074 = vmatpush1.msra.mxu0 %v861
    %2075 = vmatprep.subr.mxu0 0.0
    %2076 = vmatpush1.msra.mxu0 %v862
    %2077 = vmatprep.subr.mxu0 0.0
    %2078 = vmatpush1.msra.mxu0 %v863
    %2079 = vmatprep.subr.mxu0 0.0
    %2080 = vmatpush1.msra.mxu0 0.0
    %2081 = vmatprep.subr.mxu0 0.0
    %2082 = vmatpush1.msra.mxu0 0.0
    %2083 = vmatprep.subr.mxu0 0.0
    %2084 = vmatpush1.msra.mxu0 0.0
    %2085 = vmatprep.subr.mxu0 0.0
    %2086 = vmatpush1.msra.mxu0 0.0
    %2087 = vmatprep.subr.mxu0 0.0
    %2088 = vmatpush1.msra.mxu0 0.0
    %2089 = vmatprep.subr.mxu0 0.0
    %2090 = vmatpush1.msra.mxu0 0.0
    %2091 = vmatprep.subr.mxu0 0.0
    %2092 = vmatpush1.msra.mxu0 0.0
    %2093 = vmatprep.subr.mxu0 0.0
    %2094 = vmatpush1.msra.mxu0 0.0
    %2095 = vmatprep.subr.mxu0 0.0
    %2096 = vmatpush1.msra.mxu0 0.0
    %2097 = vmatprep.subr.mxu0 0.0
    %2098 = vmatpush1.msra.mxu0 0.0
    %2099 = vmatprep.subr.mxu0 0.0
    %2100 = vmatpush1.msra.mxu0 0.0
    %2101 = vmatprep.subr.mxu0 0.0
    %2102 = vmatpush1.msra.mxu0 0.0
    %2103 = vmatprep.subr.mxu0 0.0
    %2104 = vmatpush1.msra.mxu0 0.0
    %2105 = vmatprep.subr.mxu0 0.0
    %2106 = vmatpush1.msra.mxu0 0.0
    %2107 = vmatprep.subr.mxu0 0.0
    %2108 = vmatpush1.msra.mxu0 0.0
    %2109 = vmatprep.subr.mxu0 0.0
    %2110 = vmatpush1.msra.mxu0 0.0
    %2111 = vmatprep.mubr.f32.mxu0 0.0
    %2112 = vmatmul.mubr.f32.gmra.mrb[0].mxu0 %v2031
    %v2113 = vpop.f32.mrb[0].mxu0
    %v2114 = vadd.f32 0.0, %v2113
    %v2115 = vpop.f32.mrb[0].mxu0
    %2116 = vmatprep.mubr.f32.mxu0 0.0
    %2117 = vmatmul.mubr.f32.gmra.mrb[0].mxu0 %v2032
    %v2118 = vpop.f32.mrb[0].mxu0
    %v2119 = vadd.f32 0.0, %v2118
    %v2120 = vpop.f32.mrb[0].mxu0
    %2121 = vmatprep.mubr.f32.mxu0 0.0
    %2122 = vmatmul.mubr.f32.gmra.mrb[0].mxu0 %v2033
    %v2123 = vpop.f32.mrb[0].mxu0
    %v2124 = vadd.f32 0.0, %v2123
    %v2125 = vpop.f32.mrb[0].mxu0
    %2126 = vmatprep.mubr.f32.mxu0 0.0
    %2127 = vmatmul.mubr.f32.gmra.mrb[0].mxu0 %v2034
    %v2128 = vpop.f32.mrb[0].mxu0
    %v2129 = vadd.f32 0.0, %v2128
    %v2130 = vpop.f32.mrb[0].mxu0
    %2131 = vmatprep.mubr.f32.mxu0 0.0
    %2132 = vmatmul.mubr.f32.gmra.mrb[0].mxu0 %v2035
    %v2133 = vpop.f32.mrb[0].mxu0
    %v2134 = vadd.f32 0.0, %v2133
    %v2135 = vpop.f32.mrb[0].mxu0
    %2136 = vmatprep.mubr.f32.mxu0 0.0
    %2137 = vmatmul.mubr.f32.gmra.mrb[0].mxu0 %v2036
    %v2138 = vpop.f32.mrb[0].mxu0
    %v2139 = vadd.f32 0.0, %v2138
    %v2140 = vpop.f32.mrb[0].mxu0
    %2141 = vmatprep.mubr.f32.mxu0 0.0
    %2142 = vmatmul.mubr.f32.gmra.mrb[0].mxu0 %v2037
    %v2143 = vpop.f32.mrb[0].mxu0
    %v2144 = vadd.f32 0.0, %v2143
    %v2145 = vpop.f32.mrb[0].mxu0
    %2146 = vmatprep.mubr.f32.mxu0 0.0
    %2147 = vmatmul.mubr.f32.gmra.mrb[0].mxu0 %v2038
    %v2148 = vpop.f32.mrb[0].mxu0
    %v2149 = vadd.f32 0.0, %v2148
    %v2150 = vpop.f32.mrb[0].mxu0
    %2151 = vmatprep.mubr.f32.mxu0 0.0
    %2152 = vmatmul.mubr.f32.gmra.mrb[0].mxu0 %v2039
    %v2153 = vpop.f32.mrb[0].mxu0
    %v2154 = vadd.f32 0.0, %v2153
    %v2155 = vpop.f32.mrb[0].mxu0
    %2156 = vmatprep.mubr.f32.mxu0 0.0
    %2157 = vmatmul.mubr.f32.gmra.mrb[0].mxu0 %v2040
    %v2158 = vpop.f32.mrb[0].mxu0
    %v2159 = vadd.f32 0.0, %v2158
    %v2160 = vpop.f32.mrb[0].mxu0
    %2161 = vmatprep.mubr.f32.mxu0 0.0
    %2162 = vmatmul.mubr.f32.gmra.mrb[0].mxu0 %v2041
    %v2163 = vpop.f32.mrb[0].mxu0
    %v2164 = vadd.f32 0.0, %v2163
    %v2165 = vpop.f32.mrb[0].mxu0
    %2166 = vmatprep.mubr.f32.mxu0 0.0
    %2167 = vmatmul.mubr.f32.gmra.mrb[0].mxu0 %v2042
    %v2168 = vpop.f32.mrb[0].mxu0
    %v2169 = vadd.f32 0.0, %v2168
    %v2170 = vpop.f32.mrb[0].mxu0
    %2171 = vmatprep.mubr.f32.mxu0 0.0
    %2172 = vmatmul.mubr.f32.gmra.mrb[0].mxu0 %v2043
    %v2173 = vpop.f32.mrb[0].mxu0
    %v2174 = vadd.f32 0.0, %v2173
    %v2175 = vpop.f32.mrb[0].mxu0
    %2176 = vmatprep.mubr.f32.mxu0 0.0
    %2177 = vmatmul.mubr.f32.gmra.mrb[0].mxu0 %v2044
    %v2178 = vpop.f32.mrb[0].mxu0
    %v2179 = vadd.f32 0.0, %v2178
    %v2180 = vpop.f32.mrb[0].mxu0
    %2181 = vmatprep.mubr.f32.mxu0 0.0
    %2182 = vmatmul.mubr.f32.gmra.mrb[0].mxu0 %v2045
    %v2183 = vpop.f32.mrb[0].mxu0
    %v2184 = vadd.f32 0.0, %v2183
    %v2185 = vpop.f32.mrb[0].mxu0
    %2186 = vmatprep.mubr.f32.mxu0 0.0
    %2187 = vmatmul.mubr.f32.gmra.mrb[0].mxu0 %v2046
    %v2188 = vpop.f32.mrb[0].mxu0
    %v2189 = vadd.f32 0.0, %v2188
    %v2190 = vpop.f32.mrb[0].mxu0
    %2191 = vdwg.mxu0
    %2208 = vrot.lane.b32.xlu0 %v2114, 80
    %v2209 = vpop.permute.xlu0 %2208
    %2210 = vrot.lane.b32.xlu0 %v2119, 80
    %v2211 = vpop.permute.xlu0 %2210
    %2212 = vrot.lane.b32.xlu0 %v2124, 80
    %v2213 = vpop.permute.xlu0 %2212
    %2214 = vrot.lane.b32.xlu0 %v2129, 80
    %v2215 = vpop.permute.xlu0 %2214
    %2216 = vrot.lane.b32.xlu0 %v2134, 80
    %v2217 = vpop.permute.xlu0 %2216
    %2218 = vrot.lane.b32.xlu0 %v2139, 80
    %v2219 = vpop.permute.xlu0 %2218
    %2220 = vrot.lane.b32.xlu0 %v2144, 80
    %v2221 = vpop.permute.xlu0 %2220
    %2222 = vrot.lane.b32.xlu0 %v2149, 80
    %v2223 = vpop.permute.xlu0 %2222
    %2224 = vrot.lane.b32.xlu0 %v2154, 80
    %v2225 = vpop.permute.xlu0 %2224
    %2226 = vrot.lane.b32.xlu0 %v2159, 80
    %v2227 = vpop.permute.xlu0 %2226
    %2228 = vrot.lane.b32.xlu0 %v2164, 80
    %v2229 = vpop.permute.xlu0 %2228
    %2230 = vrot.lane.b32.xlu0 %v2169, 80
    %v2231 = vpop.permute.xlu0 %2230
    %2232 = vrot.lane.b32.xlu0 %v2174, 80
    %v2233 = vpop.permute.xlu0 %2232
    %2234 = vrot.lane.b32.xlu0 %v2179, 80
    %v2235 = vpop.permute.xlu0 %2234
    %2236 = vrot.lane.b32.xlu0 %v2184, 80
    %v2237 = vpop.permute.xlu0 %2236
    %2238 = vrot.lane.b32.xlu0 %v2189, 80
    %v2239 = vpop.permute.xlu0 %2238
    %vm2256 = vcmask 786048
    %2257 = vst.msk [vmem:[#allocation2] sm:$0xff] %vm2256, %v2209
    %2258 = vst.msk [vmem:[#allocation2 + $0x8] sm:$0xff] %vm2256, %v2211
    %2259 = vst.msk [vmem:[#allocation2 + $0x10] sm:$0xff] %vm2256, %v2213
    %2260 = vst.msk [vmem:[#allocation2 + $0x18] sm:$0xff] %vm2256, %v2215
    %2261 = vst.msk [vmem:[#allocation2 + $0x20] sm:$0xff] %vm2256, %v2217
    %2262 = vst.msk [vmem:[#allocation2 + $0x28] sm:$0xff] %vm2256, %v2219
    %2263 = vst.msk [vmem:[#allocation2 + $0x30] sm:$0xff] %vm2256, %v2221
    %2264 = vst.msk [vmem:[#allocation2 + $0x38] sm:$0xff] %vm2256, %v2223
    %2265 = vst.msk [vmem:[#allocation2 + $0x40] sm:$0xff] %vm2256, %v2225
    %2266 = vst.msk [vmem:[#allocation2 + $0x48] sm:$0xff] %vm2256, %v2227
    %2267 = vst.msk [vmem:[#allocation2 + $0x50] sm:$0xff] %vm2256, %v2229
    %2268 = vst.msk [vmem:[#allocation2 + $0x58] sm:$0xff] %vm2256, %v2231
    %2269 = vst.msk [vmem:[#allocation2 + $0x60] sm:$0xff] %vm2256, %v2233
    %2270 = vst.msk [vmem:[#allocation2 + $0x68] sm:$0xff] %vm2256, %v2235
    %2271 = vst.msk [vmem:[#allocation2 + $0x70] sm:$0xff] %vm2256, %v2237
    %2272 = vst.msk [vmem:[#allocation2 + $0x78] sm:$0xff] %vm2256, %v2239
    %s2273 = scalar_lea.vmem [#allocation3], 768
    %v2274 = vld [vmem:[%s2273] sm:$0xff]
    %v2275 = vld [vmem:[%s2273 + $0x8] sm:$0xff]
    %v2276 = vld [vmem:[%s2273 + $0x10] sm:$0xff]
    %v2277 = vld [vmem:[%s2273 + $0x18] sm:$0xff]
    %v2278 = vld [vmem:[%s2273 + $0x20] sm:$0xff]
    %v2279 = vld [vmem:[%s2273 + $0x28] sm:$0xff]
    %v2280 = vld [vmem:[%s2273 + $0x30] sm:$0xff]
    %v2281 = vld [vmem:[%s2273 + $0x38] sm:$0xff]
    %v2282 = vld [vmem:[%s2273 + $0x40] sm:$0xff]
    %v2283 = vld [vmem:[%s2273 + $0x48] sm:$0xff]
    %v2284 = vld [vmem:[%s2273 + $0x50] sm:$0xff]
    %v2285 = vld [vmem:[%s2273 + $0x58] sm:$0xff]
    %v2286 = vld [vmem:[%s2273 + $0x60] sm:$0xff]
    %v2287 = vld [vmem:[%s2273 + $0x68] sm:$0xff]
    %v2288 = vld [vmem:[%s2273 + $0x70] sm:$0xff]
    %v2289 = vld [vmem:[%s2273 + $0x78] sm:$0xff]
    %2290 = vmatprep.subr.mxu0 0.0
    %2291 = vmatpush1.msra.mxu0 %v848
    %2292 = vmatprep.subr.mxu0 0.0
    %2293 = vmatpush1.msra.mxu0 %v849
    %2294 = vmatprep.subr.mxu0 0.0
    %2295 = vmatpush1.msra.mxu0 %v850
    %2296 = vmatprep.subr.mxu0 0.0
    %2297 = vmatpush1.msra.mxu0 %v851
    %2298 = vmatprep.subr.mxu0 0.0
    %2299 = vmatpush1.msra.mxu0 %v852
    %2300 = vmatprep.subr.mxu0 0.0
    %2301 = vmatpush1.msra.mxu0 %v853
    %2302 = vmatprep.subr.mxu0 0.0
    %2303 = vmatpush1.msra.mxu0 %v854
    %2304 = vmatprep.subr.mxu0 0.0
    %2305 = vmatpush1.msra.mxu0 %v855
    %2306 = vmatprep.subr.mxu0 0.0
    %2307 = vmatpush1.msra.mxu0 %v856
    %2308 = vmatprep.subr.mxu0 0.0
    %2309 = vmatpush1.msra.mxu0 %v857
    %2310 = vmatprep.subr.mxu0 0.0
    %2311 = vmatpush1.msra.mxu0 %v858
    %2312 = vmatprep.subr.mxu0 0.0
    %2313 = vmatpush1.msra.mxu0 %v859
    %2314 = vmatprep.subr.mxu0 0.0
    %2315 = vmatpush1.msra.mxu0 %v860
    %2316 = vmatprep.subr.mxu0 0.0
    %2317 = vmatpush1.msra.mxu0 %v861
    %2318 = vmatprep.subr.mxu0 0.0
    %2319 = vmatpush1.msra.mxu0 %v862
    %2320 = vmatprep.subr.mxu0 0.0
    %2321 = vmatpush1.msra.mxu0 %v863
    %2322 = vmatprep.subr.mxu0 0.0
    %2323 = vmatpush1.msra.mxu0 0.0
    %2324 = vmatprep.subr.mxu0 0.0
    %2325 = vmatpush1.msra.mxu0 0.0
    %2326 = vmatprep.subr.mxu0 0.0
    %2327 = vmatpush1.msra.mxu0 0.0
    %2328 = vmatprep.subr.mxu0 0.0
    %2329 = vmatpush1.msra.mxu0 0.0
    %2330 = vmatprep.subr.mxu0 0.0
    %2331 = vmatpush1.msra.mxu0 0.0
    %2332 = vmatprep.subr.mxu0 0.0
    %2333 = vmatpush1.msra.mxu0 0.0
    %2334 = vmatprep.subr.mxu0 0.0
    %2335 = vmatpush1.msra.mxu0 0.0
    %2336 = vmatprep.subr.mxu0 0.0
    %2337 = vmatpush1.msra.mxu0 0.0
    %2338 = vmatprep.subr.mxu0 0.0
    %2339 = vmatpush1.msra.mxu0 0.0
    %2340 = vmatprep.subr.mxu0 0.0
    %2341 = vmatpush1.msra.mxu0 0.0
    %2342 = vmatprep.subr.mxu0 0.0
    %2343 = vmatpush1.msra.mxu0 0.0
    %2344 = vmatprep.subr.mxu0 0.0
    %2345 = vmatpush1.msra.mxu0 0.0
    %2346 = vmatprep.subr.mxu0 0.0
    %2347 = vmatpush1.msra.mxu0 0.0
    %2348 = vmatprep.subr.mxu0 0.0
    %2349 = vmatpush1.msra.mxu0 0.0
    %2350 = vmatprep.subr.mxu0 0.0
    %2351 = vmatpush1.msra.mxu0 0.0
    %2352 = vmatprep.subr.mxu0 0.0
    %2353 = vmatpush1.msra.mxu0 0.0
    %2354 = vmatprep.mubr.f32.mxu0 0.0
    %2355 = vmatmul.mubr.f32.gmra.mrb[0].mxu0 %v2274
    %v2356 = vpop.f32.mrb[0].mxu0
    %v2357 = vadd.f32 0.0, %v2356
    %v2358 = vpop.f32.mrb[0].mxu0
    %2359 = vmatprep.mubr.f32.mxu0 0.0
    %2360 = vmatmul.mubr.f32.gmra.mrb[0].mxu0 %v2275
    %v2361 = vpop.f32.mrb[0].mxu0
    %v2362 = vadd.f32 0.0, %v2361
    %v2363 = vpop.f32.mrb[0].mxu0
    %2364 = vmatprep.mubr.f32.mxu0 0.0
    %2365 = vmatmul.mubr.f32.gmra.mrb[0].mxu0 %v2276
    %v2366 = vpop.f32.mrb[0].mxu0
    %v2367 = vadd.f32 0.0, %v2366
    %v2368 = vpop.f32.mrb[0].mxu0
    %2369 = vmatprep.mubr.f32.mxu0 0.0
    %2370 = vmatmul.mubr.f32.gmra.mrb[0].mxu0 %v2277
    %v2371 = vpop.f32.mrb[0].mxu0
    %v2372 = vadd.f32 0.0, %v2371
    %v2373 = vpop.f32.mrb[0].mxu0
    %2374 = vmatprep.mubr.f32.mxu0 0.0
    %2375 = vmatmul.mubr.f32.gmra.mrb[0].mxu0 %v2278
    %v2376 = vpop.f32.mrb[0].mxu0
    %v2377 = vadd.f32 0.0, %v2376
    %v2378 = vpop.f32.mrb[0].mxu0
    %2379 = vmatprep.mubr.f32.mxu0 0.0
    %2380 = vmatmul.mubr.f32.gmra.mrb[0].mxu0 %v2279
    %v2381 = vpop.f32.mrb[0].mxu0
    %v2382 = vadd.f32 0.0, %v2381
    %v2383 = vpop.f32.mrb[0].mxu0
    %2384 = vmatprep.mubr.f32.mxu0 0.0
    %2385 = vmatmul.mubr.f32.gmra.mrb[0].mxu0 %v2280
    %v2386 = vpop.f32.mrb[0].mxu0
    %v2387 = vadd.f32 0.0, %v2386
    %v2388 = vpop.f32.mrb[0].mxu0
    %2389 = vmatprep.mubr.f32.mxu0 0.0
    %2390 = vmatmul.mubr.f32.gmra.mrb[0].mxu0 %v2281
    %v2391 = vpop.f32.mrb[0].mxu0
    %v2392 = vadd.f32 0.0, %v2391
    %v2393 = vpop.f32.mrb[0].mxu0
    %2394 = vmatprep.mubr.f32.mxu0 0.0
    %2395 = vmatmul.mubr.f32.gmra.mrb[0].mxu0 %v2282
    %v2396 = vpop.f32.mrb[0].mxu0
    %v2397 = vadd.f32 0.0, %v2396
    %v2398 = vpop.f32.mrb[0].mxu0
    %2399 = vmatprep.mubr.f32.mxu0 0.0
    %2400 = vmatmul.mubr.f32.gmra.mrb[0].mxu0 %v2283
    %v2401 = vpop.f32.mrb[0].mxu0
    %v2402 = vadd.f32 0.0, %v2401
    %v2403 = vpop.f32.mrb[0].mxu0
    %2404 = vmatprep.mubr.f32.mxu0 0.0
    %2405 = vmatmul.mubr.f32.gmra.mrb[0].mxu0 %v2284
    %v2406 = vpop.f32.mrb[0].mxu0
    %v2407 = vadd.f32 0.0, %v2406
    %v2408 = vpop.f32.mrb[0].mxu0
    %2409 = vmatprep.mubr.f32.mxu0 0.0
    %2410 = vmatmul.mubr.f32.gmra.mrb[0].mxu0 %v2285
    %v2411 = vpop.f32.mrb[0].mxu0
    %v2412 = vadd.f32 0.0, %v2411
    %v2413 = vpop.f32.mrb[0].mxu0
    %2414 = vmatprep.mubr.f32.mxu0 0.0
    %2415 = vmatmul.mubr.f32.gmra.mrb[0].mxu0 %v2286
    %v2416 = vpop.f32.mrb[0].mxu0
    %v2417 = vadd.f32 0.0, %v2416
    %v2418 = vpop.f32.mrb[0].mxu0
    %2419 = vmatprep.mubr.f32.mxu0 0.0
    %2420 = vmatmul.mubr.f32.gmra.mrb[0].mxu0 %v2287
    %v2421 = vpop.f32.mrb[0].mxu0
    %v2422 = vadd.f32 0.0, %v2421
    %v2423 = vpop.f32.mrb[0].mxu0
    %2424 = vmatprep.mubr.f32.mxu0 0.0
    %2425 = vmatmul.mubr.f32.gmra.mrb[0].mxu0 %v2288
    %v2426 = vpop.f32.mrb[0].mxu0
    %v2427 = vadd.f32 0.0, %v2426
    %v2428 = vpop.f32.mrb[0].mxu0
    %2429 = vmatprep.mubr.f32.mxu0 0.0
    %2430 = vmatmul.mubr.f32.gmra.mrb[0].mxu0 %v2289
    %v2431 = vpop.f32.mrb[0].mxu0
    %v2432 = vadd.f32 0.0, %v2431
    %v2433 = vpop.f32.mrb[0].mxu0
    %2434 = vdwg.mxu0
    %2451 = vrot.lane.b32.xlu0 %v2357, 96
    %v2452 = vpop.permute.xlu0 %2451
    %2453 = vrot.lane.b32.xlu0 %v2362, 96
    %v2454 = vpop.permute.xlu0 %2453
    %2455 = vrot.lane.b32.xlu0 %v2367, 96
    %v2456 = vpop.permute.xlu0 %2455
    %2457 = vrot.lane.b32.xlu0 %v2372, 96
    %v2458 = vpop.permute.xlu0 %2457
    %2459 = vrot.lane.b32.xlu0 %v2377, 96
    %v2460 = vpop.permute.xlu0 %2459
    %2461 = vrot.lane.b32.xlu0 %v2382, 96
    %v2462 = vpop.permute.xlu0 %2461
    %2463 = vrot.lane.b32.xlu0 %v2387, 96
    %v2464 = vpop.permute.xlu0 %2463
    %2465 = vrot.lane.b32.xlu0 %v2392, 96
    %v2466 = vpop.permute.xlu0 %2465
    %2467 = vrot.lane.b32.xlu0 %v2397, 96
    %v2468 = vpop.permute.xlu0 %2467
    %2469 = vrot.lane.b32.xlu0 %v2402, 96
    %v2470 = vpop.permute.xlu0 %2469
    %2471 = vrot.lane.b32.xlu0 %v2407, 96
    %v2472 = vpop.permute.xlu0 %2471
    %2473 = vrot.lane.b32.xlu0 %v2412, 96
    %v2474 = vpop.permute.xlu0 %2473
    %2475 = vrot.lane.b32.xlu0 %v2417, 96
    %v2476 = vpop.permute.xlu0 %2475
    %2477 = vrot.lane.b32.xlu0 %v2422, 96
    %v2478 = vpop.permute.xlu0 %2477
    %2479 = vrot.lane.b32.xlu0 %v2427, 96
    %v2480 = vpop.permute.xlu0 %2479
    %2481 = vrot.lane.b32.xlu0 %v2432, 96
    %v2482 = vpop.permute.xlu0 %2481
    %vm2499 = vcmask 917248
    %2500 = vst.msk [vmem:[#allocation2] sm:$0xff] %vm2499, %v2452
    %2501 = vst.msk [vmem:[#allocation2 + $0x8] sm:$0xff] %vm2499, %v2454
    %2502 = vst.msk [vmem:[#allocation2 + $0x10] sm:$0xff] %vm2499, %v2456
    %2503 = vst.msk [vmem:[#allocation2 + $0x18] sm:$0xff] %vm2499, %v2458
    %2504 = vst.msk [vmem:[#allocation2 + $0x20] sm:$0xff] %vm2499, %v2460
    %2505 = vst.msk [vmem:[#allocation2 + $0x28] sm:$0xff] %vm2499, %v2462
    %2506 = vst.msk [vmem:[#allocation2 + $0x30] sm:$0xff] %vm2499, %v2464
    %2507 = vst.msk [vmem:[#allocation2 + $0x38] sm:$0xff] %vm2499, %v2466
    %2508 = vst.msk [vmem:[#allocation2 + $0x40] sm:$0xff] %vm2499, %v2468
    %2509 = vst.msk [vmem:[#allocation2 + $0x48] sm:$0xff] %vm2499, %v2470
    %2510 = vst.msk [vmem:[#allocation2 + $0x50] sm:$0xff] %vm2499, %v2472
    %2511 = vst.msk [vmem:[#allocation2 + $0x58] sm:$0xff] %vm2499, %v2474
    %2512 = vst.msk [vmem:[#allocation2 + $0x60] sm:$0xff] %vm2499, %v2476
    %2513 = vst.msk [vmem:[#allocation2 + $0x68] sm:$0xff] %vm2499, %v2478
    %2514 = vst.msk [vmem:[#allocation2 + $0x70] sm:$0xff] %vm2499, %v2480
    %2515 = vst.msk [vmem:[#allocation2 + $0x78] sm:$0xff] %vm2499, %v2482
    %v2516 = vld [vmem:[#allocation2] sm:$0xff]
    %v2517 = vld [vmem:[#allocation2 + $0x8] sm:$0xff]
    %v2518 = vld [vmem:[#allocation2 + $0x10] sm:$0xff]
    %v2519 = vld [vmem:[#allocation2 + $0x18] sm:$0xff]
    %v2520 = vld [vmem:[#allocation2 + $0x20] sm:$0xff]
    %v2521 = vld [vmem:[#allocation2 + $0x28] sm:$0xff]
    %v2522 = vld [vmem:[#allocation2 + $0x30] sm:$0xff]
    %v2523 = vld [vmem:[#allocation2 + $0x38] sm:$0xff]
    %v2524 = vld [vmem:[#allocation2 + $0x40] sm:$0xff]
    %v2525 = vld [vmem:[#allocation2 + $0x48] sm:$0xff]
    %v2526 = vld [vmem:[#allocation2 + $0x50] sm:$0xff]
    %v2527 = vld [vmem:[#allocation2 + $0x58] sm:$0xff]
    %v2528 = vld [vmem:[#allocation2 + $0x60] sm:$0xff]
    %v2529 = vld [vmem:[#allocation2 + $0x68] sm:$0xff]
    %v2530 = vld [vmem:[#allocation2 + $0x70] sm:$0xff]
    %v2531 = vld [vmem:[#allocation2 + $0x78] sm:$0xff]
    %v2532 = vld [vmem:[%s4] sm:$0xff]
    %v2533 = vld [vmem:[%s4 + $0x8] sm:$0xff]
    %v2534 = vld [vmem:[%s4 + $0x10] sm:$0xff]
    %v2535 = vld [vmem:[%s4 + $0x18] sm:$0xff]
    %v2536 = vld [vmem:[%s4 + $0x20] sm:$0xff]
    %v2537 = vld [vmem:[%s4 + $0x28] sm:$0xff]
    %v2538 = vld [vmem:[%s4 + $0x30] sm:$0xff]
    %v2539 = vld [vmem:[%s4 + $0x38] sm:$0xff]
    %v2540 = vld [vmem:[%s4 + $0x40] sm:$0xff]
    %v2541 = vld [vmem:[%s4 + $0x48] sm:$0xff]
    %v2542 = vld [vmem:[%s4 + $0x50] sm:$0xff]
    %v2543 = vld [vmem:[%s4 + $0x58] sm:$0xff]
    %v2544 = vld [vmem:[%s4 + $0x60] sm:$0xff]
    %v2545 = vld [vmem:[%s4 + $0x68] sm:$0xff]
    %v2546 = vld [vmem:[%s4 + $0x70] sm:$0xff]
    %v2547 = vld [vmem:[%s4 + $0x78] sm:$0xff]
    %v2548 = vld [vmem:[%s5] sm:$0x1]
    %v2550 = vlaneseq
    %v2551 = vshrl.u32 %v2550, 7
    %v2552 = vsub.s32 0, %v2551
    %v2553 = vrot.slane %v2548, %v2552
    %2555 = vmatprep.subr.mxu0 0.0
    %2556 = vmatpush1.msra.mxu0 %v2532
    %2557 = vmatprep.subr.mxu0 0.0
    %2558 = vmatpush1.msra.mxu0 %v2533
    %2559 = vmatprep.subr.mxu0 0.0
    %2560 = vmatpush1.msra.mxu0 %v2534
    %2561 = vmatprep.subr.mxu0 0.0
    %2562 = vmatpush1.msra.mxu0 %v2535
    %2563 = vmatprep.subr.mxu0 0.0
    %2564 = vmatpush1.msra.mxu0 %v2536
    %2565 = vmatprep.subr.mxu0 0.0
    %2566 = vmatpush1.msra.mxu0 %v2537
    %2567 = vmatprep.subr.mxu0 0.0
    %2568 = vmatpush1.msra.mxu0 %v2538
    %2569 = vmatprep.subr.mxu0 0.0
    %2570 = vmatpush1.msra.mxu0 %v2539
    %2571 = vmatprep.subr.mxu0 0.0
    %2572 = vmatpush1.msra.mxu0 %v2540
    %2573 = vmatprep.subr.mxu0 0.0
    %2574 = vmatpush1.msra.mxu0 %v2541
    %2575 = vmatprep.subr.mxu0 0.0
    %2576 = vmatpush1.msra.mxu0 %v2542
    %2577 = vmatprep.subr.mxu0 0.0
    %2578 = vmatpush1.msra.mxu0 %v2543
    %2579 = vmatprep.subr.mxu0 0.0
    %2580 = vmatpush1.msra.mxu0 %v2544
    %2581 = vmatprep.subr.mxu0 0.0
    %2582 = vmatpush1.msra.mxu0 %v2545
    %2583 = vmatprep.subr.mxu0 0.0
    %2584 = vmatpush1.msra.mxu0 %v2546
    %2585 = vmatprep.subr.mxu0 0.0
    %2586 = vmatpush1.msra.mxu0 %v2547
    %2587 = vmatprep.subr.mxu0 0.0
    %2588 = vmatpush1.msra.mxu0 0.0
    %2589 = vmatprep.subr.mxu0 0.0
    %2590 = vmatpush1.msra.mxu0 0.0
    %2591 = vmatprep.subr.mxu0 0.0
    %2592 = vmatpush1.msra.mxu0 0.0
    %2593 = vmatprep.subr.mxu0 0.0
    %2594 = vmatpush1.msra.mxu0 0.0
    %2595 = vmatprep.subr.mxu0 0.0
    %2596 = vmatpush1.msra.mxu0 0.0
    %2597 = vmatprep.subr.mxu0 0.0
    %2598 = vmatpush1.msra.mxu0 0.0
    %2599 = vmatprep.subr.mxu0 0.0
    %2600 = vmatpush1.msra.mxu0 0.0
    %2601 = vmatprep.subr.mxu0 0.0
    %2602 = vmatpush1.msra.mxu0 0.0
    %2603 = vmatprep.subr.mxu0 0.0
    %2604 = vmatpush1.msra.mxu0 0.0
    %2605 = vmatprep.subr.mxu0 0.0
    %2606 = vmatpush1.msra.mxu0 0.0
    %2607 = vmatprep.subr.mxu0 0.0
    %2608 = vmatpush1.msra.mxu0 0.0
    %2609 = vmatprep.subr.mxu0 0.0
    %2610 = vmatpush1.msra.mxu0 0.0
    %2611 = vmatprep.subr.mxu0 0.0
    %2612 = vmatpush1.msra.mxu0 0.0
    %2613 = vmatprep.subr.mxu0 0.0
    %2614 = vmatpush1.msra.mxu0 0.0
    %2615 = vmatprep.subr.mxu0 0.0
    %2616 = vmatpush1.msra.mxu0 0.0
    %2617 = vmatprep.subr.mxu0 0.0
    %2618 = vmatpush1.msra.mxu0 0.0
    %2619 = vmatprep.mubr.f32.mxu0 0.0
    %2620 = vmatmul.mubr.f32.gmra.mrb[0].mxu0 %v2516
    %v2621 = vpop.f32.mrb[0].mxu0
    %v2622 = vadd.f32 %v2553, %v2621
    %v2623 = vpop.f32.mrb[0].mxu0
    %2624 = vmatprep.mubr.f32.mxu0 0.0
    %2625 = vmatmul.mubr.f32.gmra.mrb[0].mxu0 %v2517
    %v2626 = vpop.f32.mrb[0].mxu0
    %v2627 = vadd.f32 %v2553, %v2626
    %v2628 = vpop.f32.mrb[0].mxu0
    %2629 = vmatprep.mubr.f32.mxu0 0.0
    %2630 = vmatmul.mubr.f32.gmra.mrb[0].mxu0 %v2518
    %v2631 = vpop.f32.mrb[0].mxu0
    %v2632 = vadd.f32 %v2553, %v2631
    %v2633 = vpop.f32.mrb[0].mxu0
    %2634 = vmatprep.mubr.f32.mxu0 0.0
    %2635 = vmatmul.mubr.f32.gmra.mrb[0].mxu0 %v2519
    %v2636 = vpop.f32.mrb[0].mxu0
    %v2637 = vadd.f32 %v2553, %v2636
    %v2638 = vpop.f32.mrb[0].mxu0
    %2639 = vmatprep.mubr.f32.mxu0 0.0
    %2640 = vmatmul.mubr.f32.gmra.mrb[0].mxu0 %v2520
    %v2641 = vpop.f32.mrb[0].mxu0
    %v2642 = vadd.f32 %v2553, %v2641
    %v2643 = vpop.f32.mrb[0].mxu0
    %2644 = vmatprep.mubr.f32.mxu0 0.0
    %2645 = vmatmul.mubr.f32.gmra.mrb[0].mxu0 %v2521
    %v2646 = vpop.f32.mrb[0].mxu0
    %v2647 = vadd.f32 %v2553, %v2646
    %v2648 = vpop.f32.mrb[0].mxu0
    %2649 = vmatprep.mubr.f32.mxu0 0.0
    %2650 = vmatmul.mubr.f32.gmra.mrb[0].mxu0 %v2522
    %v2651 = vpop.f32.mrb[0].mxu0
    %v2652 = vadd.f32 %v2553, %v2651
    %v2653 = vpop.f32.mrb[0].mxu0
    %2654 = vmatprep.mubr.f32.mxu0 0.0
    %2655 = vmatmul.mubr.f32.gmra.mrb[0].mxu0 %v2523
    %v2656 = vpop.f32.mrb[0].mxu0
    %v2657 = vadd.f32 %v2553, %v2656
    %v2658 = vpop.f32.mrb[0].mxu0
    %2659 = vmatprep.mubr.f32.mxu0 0.0
    %2660 = vmatmul.mubr.f32.gmra.mrb[0].mxu0 %v2524
    %v2661 = vpop.f32.mrb[0].mxu0
    %v2662 = vadd.f32 %v2553, %v2661
    %v2663 = vpop.f32.mrb[0].mxu0
    %2664 = vmatprep.mubr.f32.mxu0 0.0
    %2665 = vmatmul.mubr.f32.gmra.mrb[0].mxu0 %v2525
    %v2666 = vpop.f32.mrb[0].mxu0
    %v2667 = vadd.f32 %v2553, %v2666
    %v2668 = vpop.f32.mrb[0].mxu0
    %2669 = vmatprep.mubr.f32.mxu0 0.0
    %2670 = vmatmul.mubr.f32.gmra.mrb[0].mxu0 %v2526
    %v2671 = vpop.f32.mrb[0].mxu0
    %v2672 = vadd.f32 %v2553, %v2671
    %v2673 = vpop.f32.mrb[0].mxu0
    %2674 = vmatprep.mubr.f32.mxu0 0.0
    %2675 = vmatmul.mubr.f32.gmra.mrb[0].mxu0 %v2527
    %v2676 = vpop.f32.mrb[0].mxu0
    %v2677 = vadd.f32 %v2553, %v2676
    %v2678 = vpop.f32.mrb[0].mxu0
    %2679 = vmatprep.mubr.f32.mxu0 0.0
    %2680 = vmatmul.mubr.f32.gmra.mrb[0].mxu0 %v2528
    %v2681 = vpop.f32.mrb[0].mxu0
    %v2682 = vadd.f32 %v2553, %v2681
    %v2683 = vpop.f32.mrb[0].mxu0
    %2684 = vmatprep.mubr.f32.mxu0 0.0
    %2685 = vmatmul.mubr.f32.gmra.mrb[0].mxu0 %v2529
    %v2686 = vpop.f32.mrb[0].mxu0
    %v2687 = vadd.f32 %v2553, %v2686
    %v2688 = vpop.f32.mrb[0].mxu0
    %2689 = vmatprep.mubr.f32.mxu0 0.0
    %2690 = vmatmul.mubr.f32.gmra.mrb[0].mxu0 %v2530
    %v2691 = vpop.f32.mrb[0].mxu0
    %v2692 = vadd.f32 %v2553, %v2691
    %v2693 = vpop.f32.mrb[0].mxu0
    %2694 = vmatprep.mubr.f32.mxu0 0.0
    %2695 = vmatmul.mubr.f32.gmra.mrb[0].mxu0 %v2531
    %v2696 = vpop.f32.mrb[0].mxu0
    %v2697 = vadd.f32 %v2553, %v2696
    %v2698 = vpop.f32.mrb[0].mxu0
    %2699 = vdwg.mxu0
    %vm2700 = vcmask 64512
    %2701 = vst.msk [vmem:[%s6] sm:$0xff] %vm2700, %v2622
    %2702 = vst.msk [vmem:[%s6 + $0x8] sm:$0xff] %vm2700, %v2627
    %2703 = vst.msk [vmem:[%s6 + $0x10] sm:$0xff] %vm2700, %v2632
    %2704 = vst.msk [vmem:[%s6 + $0x18] sm:$0xff] %vm2700, %v2637
    %2705 = vst.msk [vmem:[%s6 + $0x20] sm:$0xff] %vm2700, %v2642
    %2706 = vst.msk [vmem:[%s6 + $0x28] sm:$0xff] %vm2700, %v2647
    %2707 = vst.msk [vmem:[%s6 + $0x30] sm:$0xff] %vm2700, %v2652
    %2708 = vst.msk [vmem:[%s6 + $0x38] sm:$0xff] %vm2700, %v2657
    %2709 = vst.msk [vmem:[%s6 + $0x40] sm:$0xff] %vm2700, %v2662
    %2710 = vst.msk [vmem:[%s6 + $0x48] sm:$0xff] %vm2700, %v2667
    %2711 = vst.msk [vmem:[%s6 + $0x50] sm:$0xff] %vm2700, %v2672
    %2712 = vst.msk [vmem:[%s6 + $0x58] sm:$0xff] %vm2700, %v2677
    %2713 = vst.msk [vmem:[%s6 + $0x60] sm:$0xff] %vm2700, %v2682
    %2714 = vst.msk [vmem:[%s6 + $0x68] sm:$0xff] %vm2700, %v2687
    %2715 = vst.msk [vmem:[%s6 + $0x70] sm:$0xff] %vm2700, %v2692
    %2716 = vst.msk [vmem:[%s6 + $0x78] sm:$0xff] %vm2700, %v2697
    // Predicated region
    $region30: #{tpu_custom_call.1} parent=1 // pred_check
      _
    $region31: #{tpu_custom_call.1} parent=1 // pred_check_branch
      %2718 = sbr.rel (0) target = $region33
    $region32: #{tpu_custom_call.1} parent=1 // pred_region
      _
    $region33: #{tpu_custom_call.1} parent=1 // pred_fallthru
      _
    // Predicated region
    $region34: #{tpu_custom_call.1} parent=1 // pred_check
      _
    $region35: #{tpu_custom_call.1} parent=1 // pred_check_branch
      %2720 = sbr.rel (0) target = $region37
    $region36: #{tpu_custom_call.1} parent=1 // pred_region
      _
    $region37: #{tpu_custom_call.1} parent=1 // pred_fallthru
      _
    %2721 = vsyncpa [#allocation4], 1

</llo_original>
